<compile_context>
chip_gen: v7x
topology: tpu7x:2x2x1
jax: 0.10.0
libtpu: 0.0.40
codegen_flags: <defaults>
</compile_context>

<pallas_src>
import functools

import jax
import jax.numpy as jnp
from jax.experimental import pallas as pl
from jax.experimental.pallas import tpu as pltpu


def _lstm_head_kernel(x_ref, wih_ref, whh_hbm, b_ref, wlin_ref, blin_ref,
                      out_ref, xg_scr, whh_vmem, whh_sem,
                      *, seq_len, batch, batch_padded, unroll):
    """Single-invocation LSTM recurrence + linear head.

    x_ref:    (S*Bp, E)  time-major flattened embedded input, batch padded to Bp (VMEM)
    wih_ref:  (E, 4H)    W_ih^T, i/f/o columns pre-scaled by 0.5 (VMEM, f32)
    whh_hbm:  (H, 4H)    W_hh^T, i/f/o columns pre-scaled by 0.5 (HBM, bf16, manual DMA)
    b_ref:    (1, 4H)    (b_ih + b_hh), i/f/o block pre-scaled by 0.5 (VMEM, f32)
    wlin_ref: (2, H)     head weights: row 0 multiplies h_n, row 1 multiplies c_n (VMEM)
    blin_ref: (1, 1)     head bias scalar (SMEM)
    out_ref:  (B, 1)     output (VMEM)
    xg_scr:   (S*Bp, 4H) VMEM scratch holding the hoisted input projection
    whh_vmem: (H, 4H)    bf16 VMEM landing buffer for W_hh^T
    whh_sem:  DMA semaphore for the W_hh^T copy
    """
    H = whh_vmem.shape[0]
    Bp = batch_padded

    # --- start the W_hh^T HBM->VMEM DMA; overlapped with the matmul below ----
    whh_copy = pltpu.make_async_copy(whh_hbm, whh_vmem, whh_sem)
    whh_copy.start()

    # --- hoisted input projection: ONE MXU matmul for all time steps ---------
    xg_scr[...] = (jnp.dot(x_ref[...], wih_ref[...],
                           preferred_element_type=jnp.float32)
                   + b_ref[...])

    # W_hh^T must be resident before the recurrence touches it.
    whh_copy.wait()

    # --- serial recurrence: only h @ W_hh (bf16) + one tanh pass per step ----
    def step(t, carry):
        h, c = carry                                         # f32 (Bp, H)
        row0 = pl.multiple_of(t * Bp, Bp)                    # tile-aligned slice
        gates = (xg_scr[pl.ds(row0, Bp), :]                  # (Bp, 4H) f32
                 + jnp.dot(h.astype(jnp.bfloat16), whh_vmem[...],
                           preferred_element_type=jnp.float32))
        # Single EUP pass: i/f/o gate columns carry z/2 (pre-scaled in the
        # wrapper), so sigmoid(z) = 0.5*tanh(z/2) + 0.5; the g column carries z.
        t_all = jnp.tanh(gates)
        i_g = 0.5 * t_all[:, 0 * H:1 * H] + 0.5
        f_g = 0.5 * t_all[:, 1 * H:2 * H] + 0.5
        g_g = t_all[:, 2 * H:3 * H]
        o_g = 0.5 * t_all[:, 3 * H:4 * H] + 0.5
        c_new = f_g * c + i_g * g_g
        h_new = o_g * jnp.tanh(c_new)
        return h_new, c_new

    h0 = jnp.zeros((Bp, H), jnp.float32)
    c0 = jnp.zeros((Bp, H), jnp.float32)
    h_n, c_n = jax.lax.fori_loop(0, seq_len, step, (h0, c0), unroll=unroll)

    # --- head: linear(2H -> 1) on cat(h_n, c_n) without a concat or an N=1 ---
    # MXU matmul: VPU multiplies + XLU lane reductions.  Padded batch rows
    # (which accumulate bias-driven nonzero state) are dropped at this store.
    out = (jnp.sum(h_n * wlin_ref[0:1, :], axis=-1, keepdims=True)
           + jnp.sum(c_n * wlin_ref[1:2, :], axis=-1, keepdims=True)
           + blin_ref[0, 0])
    out_ref[...] = out[:batch, :]


def lstm_head_forward(x_emb_bse, w_ih, w_hh, b_ih, b_hh, w_lin, b_lin):
    """Forward pass matching the PyTorch Model (eval mode, dropout = identity).

    x_emb_bse: (B, S, E) float32 embedded input (batch_first, like nn.LSTM).
    w_ih: (4H, E), w_hh: (4H, H), b_ih/b_hh: (4H,)   [PyTorch nn.LSTM layout]
    w_lin: (1, 2H), b_lin: (1,)                      [PyTorch nn.Linear layout]
    Returns (B, 1).
    """
    B, S, E = x_emb_bse.shape
    H = w_hh.shape[1]
    Bp = ((B + 7) // 8) * 8          # pad batch to the f32 sublane count

    # --- one-time parameter plumbing (outside the kernel) --------------------
    # Pre-scale the i/f/o gate rows by 0.5 (exact) so the kernel applies a
    # single tanh pass to all four gate blocks: sigmoid(z) = 0.5*tanh(z/2)+0.5.
    ifo_scale = jnp.full((4 * H,), 0.5, jnp.float32).at[2 * H:3 * H].set(1.0)
    wih_t = (w_ih * ifo_scale[:, None]).T                          # (E, 4H) f32
    whh_t = (w_hh * ifo_scale[:, None]).T.astype(jnp.bfloat16)     # (H, 4H) bf16
    bias = ((b_ih + b_hh) * ifo_scale).reshape(1, 4 * H)           # (1, 4H) f32
    wlin2 = w_lin.reshape(2, H)                                    # row 0 -> h_n, row 1 -> c_n
    blin = b_lin.reshape(1, 1)                                     # (1, 1) SMEM scalar

    # Time-major, batch zero-padded to Bp, flattened to (S*Bp, E) so the whole
    # input projection is one matmul and every per-step slice is tile-aligned.
    x_pad = jnp.zeros((Bp, S, E), jnp.float32).at[:B].set(x_emb_bse)
    x2d = jnp.transpose(x_pad, (1, 0, 2)).reshape(S * Bp, E)

    # VMEM guardrail (mainly for v7x: 64 MiB core / 32 MiB default scoped, and
    # the 16 MiB v5e default): the whole sequence is VMEM-resident, so raise
    # the scoped limit explicitly once S*Bp grows past the default budget.
    vmem_bytes = (x2d.size * 4 + S * Bp * 4 * H * 4 + wih_t.size * 4
                  + whh_t.size * 2 + bias.size * 4 + wlin2.size * 4 + Bp * 4)
    compiler_params = None
    if vmem_bytes > (12 << 20):
        compiler_params = pltpu.CompilerParams(
            vmem_limit_bytes=min(2 * vmem_bytes, 48 << 20))

    # Full unroll only while S stays small; partial unroll beyond that.
    unroll = True if S <= 32 else 8

    kernel = functools.partial(_lstm_head_kernel, seq_len=S, batch=B,
                               batch_padded=Bp, unroll=unroll)
    return pl.pallas_call(
        kernel,
        out_shape=jax.ShapeDtypeStruct((B, 1), jnp.float32),
        in_specs=[
            pl.BlockSpec(memory_space=pltpu.MemorySpace.VMEM),   # x       (S*Bp, E)
            pl.BlockSpec(memory_space=pltpu.MemorySpace.VMEM),   # W_ih^T  (E, 4H)
            pl.BlockSpec(memory_space=pl.ANY),                   # W_hh^T  (H, 4H) bf16, HBM
            pl.BlockSpec(memory_space=pltpu.MemorySpace.VMEM),   # bias    (1, 4H)
            pl.BlockSpec(memory_space=pltpu.MemorySpace.VMEM),   # head w  (2, H)
            pl.BlockSpec(memory_space=pltpu.MemorySpace.SMEM),   # head b  (1, 1)
        ],
        out_specs=pl.BlockSpec(memory_space=pltpu.MemorySpace.VMEM),
        scratch_shapes=[
            pltpu.VMEM((S * Bp, 4 * H), jnp.float32),   # hoisted x-projection
            pltpu.VMEM((H, 4 * H), jnp.bfloat16),       # W_hh^T landing buffer
            pltpu.SemaphoreType.DMA(()),                # W_hh^T DMA completion
        ],
        compiler_params=compiler_params,
    )(x2d, wih_t, whh_t, bias, wlin2, blin)


def _reference_forward(x_emb_bse, w_ih, w_hh, b_ih, b_hh, w_lin, b_lin):
    """Pure-JAX f32 reference mirroring the PyTorch forward (eval mode)."""
    B, S, E = x_emb_bse.shape
    H = w_hh.shape[1]

    def step(carry, x_t):
        h, c = carry
        gates = x_t @ w_ih.T + b_ih + h @ w_hh.T + b_hh
        i = jax.nn.sigmoid(gates[:, 0 * H:1 * H])
        f = jax.nn.sigmoid(gates[:, 1 * H:2 * H])
        g = jnp.tanh(gates[:, 2 * H:3 * H])
        o = jax.nn.sigmoid(gates[:, 3 * H:4 * H])
        c = f * c + i * g
        h = o * jnp.tanh(c)
        return (h, c), None

    h0 = jnp.zeros((B, H), jnp.float32)
    c0 = jnp.zeros((B, H), jnp.float32)
    (h_n, c_n), _ = jax.lax.scan(step, (h0, c0),
                                 jnp.transpose(x_emb_bse, (1, 0, 2)))
    hc = jnp.concatenate([h_n, c_n], axis=1)          # (B, 2H)
    return hc @ w_lin.T + b_lin                        # (B, 1)


if __name__ == "__main__":
    # Small, deterministic problem sizes implied by the module.
    VOCAB = 32
    EMBED = 16         # embed_size
    HIDDEN = 128       # self.hidden_dim
    BATCH = 2
    SEQ = 8

    key = jax.random.PRNGKey(0)
    ks = jax.random.split(key, 8)
    scale = 1.0 / jnp.sqrt(HIDDEN)

    embed_table = jax.random.normal(ks[0], (VOCAB, EMBED), jnp.float32) * 0.1
    w_ih = jax.random.uniform(ks[1], (4 * HIDDEN, EMBED), jnp.float32, -scale, scale)
    w_hh = jax.random.uniform(ks[2], (4 * HIDDEN, HIDDEN), jnp.float32, -scale, scale)
    b_ih = jax.random.uniform(ks[3], (4 * HIDDEN,), jnp.float32, -scale, scale)
    b_hh = jax.random.uniform(ks[4], (4 * HIDDEN,), jnp.float32, -scale, scale)
    w_lin = jax.random.uniform(ks[5], (1, 2 * HIDDEN), jnp.float32, -scale, scale)
    b_lin = jax.random.uniform(ks[6], (1,), jnp.float32, -scale, scale)

    # Integer token ids (B, S) -> embedding lookup (glue, plain JAX gather).
    x_ids = jax.random.randint(ks[7], (BATCH, SEQ), 0, VOCAB)
    x_emb = jnp.take(embed_table, x_ids, axis=0)       # (B, S, E), batch_first

    out = lstm_head_forward(x_emb, w_ih, w_hh, b_ih, b_hh, w_lin, b_lin)
    out = jax.block_until_ready(out)

    ref = _reference_forward(x_emb, w_ih, w_hh, b_ih, b_hh, w_lin, b_lin)
    assert out.shape == (BATCH, 1)
    # bf16 recurrent matmul (f32 accumulation) + tanh-fused gates introduce
    # ~1e-3 absolute drift vs. the pure-f32 XLA reference at these scales;
    # 2e-2 keeps a >10x safety margin while still catching structural bugs.
    assert jnp.allclose(out, ref, atol=2e-2, rtol=2e-2), (out, ref)

    print("KERNEL_OK")
</pallas_src>

<mosaic_0001>
module attributes {stable_mosaic.version = 11 : i64} {
  func.func @_lstm_head_kernel(%arg0: memref<64x16xf32, #tpu.memory_space<vmem>>, %arg1: memref<16x512xf32, #tpu.memory_space<vmem>>, %arg2: memref<128x512xbf16, #tpu.memory_space<any>>, %arg3: memref<1x512xf32, #tpu.memory_space<vmem>>, %arg4: memref<2x128xf32, #tpu.memory_space<vmem>>, %arg5: memref<1x1xf32, #tpu.memory_space<smem>>, %arg6: memref<2x1xf32, #tpu.memory_space<vmem>>, %arg7: memref<64x512xf32, #tpu.memory_space<vmem>>, %arg8: memref<128x512xbf16, #tpu.memory_space<vmem>>, %arg9: memref<!tpu.dma_semaphore, #tpu.memory_space<semaphore_mem>>) attributes {dimension_semantics = [], scalar_prefetch = 0 : i64, scratch_operands = 3 : i64, tpu.core_type = #tpu.core_type<tc>} {
    tpu.enqueue_dma source(%arg2 : memref<128x512xbf16, #tpu.memory_space<any>>) target(%arg8 : memref<128x512xbf16, #tpu.memory_space<vmem>>) target_semaphore(%arg9 : memref<!tpu.dma_semaphore, #tpu.memory_space<semaphore_mem>>)
    %c0 = arith.constant 0 : index
    %c0_0 = arith.constant 0 : index
    %0 = vector.load %arg0[%c0, %c0_0] : memref<64x16xf32, #tpu.memory_space<vmem>>, vector<64x16xf32>
    %c0_1 = arith.constant 0 : index
    %c0_2 = arith.constant 0 : index
    %1 = vector.load %arg1[%c0_1, %c0_2] : memref<16x512xf32, #tpu.memory_space<vmem>>, vector<16x512xf32>
    %cst = arith.constant dense<0.000000e+00> : vector<64x512xf32>
    %2 = tpu.matmul %0, %1, %cst {dimension_numbers = #tpu.dot_dimension_numbers<[1], [0], [0], [1], [0, 0, 1, 1], [], []>} : vector<64x16xf32>, vector<16x512xf32>, vector<64x512xf32> -> vector<64x512xf32>
    %c0_3 = arith.constant 0 : index
    %c0_4 = arith.constant 0 : index
    %3 = vector.load %arg3[%c0_3, %c0_4] : memref<1x512xf32, #tpu.memory_space<vmem>>, vector<1x512xf32>
    %4 = vector.broadcast %3 : vector<1x512xf32> to vector<64x512xf32>
    %5 = arith.addf %2, %4 : vector<64x512xf32>
    %c0_5 = arith.constant 0 : index
    %c0_6 = arith.constant 0 : index
    %6 = vector.load %arg7[%c0_5, %c0_6] : memref<64x512xf32, #tpu.memory_space<vmem>>, vector<64x512xf32>
    tpu.vector_store %arg7[%c0_5, %c0_6], %5 {strides = array<i32>} : memref<64x512xf32, #tpu.memory_space<vmem>>, vector<64x512xf32>,
    tpu.wait_dma2 semaphore(%arg9 : memref<!tpu.dma_semaphore, #tpu.memory_space<semaphore_mem>>) src(%arg2 : memref<128x512xbf16, #tpu.memory_space<any>>) dst(%arg8 : memref<128x512xbf16, #tpu.memory_space<vmem>>)
    %cst_7 = arith.constant 0.000000e+00 : f32
    %7 = vector.broadcast %cst_7 : f32 to vector<8x128xf32>
    %cst_8 = arith.constant 0.000000e+00 : f32
    %8 = vector.broadcast %cst_8 : f32 to vector<8x128xf32>
    %c0_i32 = arith.constant 0 : i32
    %c8_i32 = arith.constant 8 : i32
    %9 = arith.muli %c0_i32, %c8_i32 : i32
    %10 = tpu.assume_multiple %9, 8 : i32
    %11 = arith.index_cast %10 : i32 to index
    %c0_9 = arith.constant 0 : index
    %12 = vector.load %arg7[%11, %c0_9] : memref<64x512xf32, #tpu.memory_space<vmem>>, vector<8x512xf32>
    %13 = arith.truncf %7 : vector<8x128xf32> to vector<8x128xbf16>
    %c0_10 = arith.constant 0 : index
    %c0_11 = arith.constant 0 : index
    %14 = vector.load %arg8[%c0_10, %c0_11] : memref<128x512xbf16, #tpu.memory_space<vmem>>, vector<128x512xbf16>
    %cst_12 = arith.constant dense<0.000000e+00> : vector<8x512xf32>
    %15 = tpu.matmul %13, %14, %cst_12 {dimension_numbers = #tpu.dot_dimension_numbers<[1], [0], [0], [1], [0, 0, 1, 1], [], []>} : vector<8x128xbf16>, vector<128x512xbf16>, vector<8x512xf32> -> vector<8x512xf32>
    %16 = arith.addf %12, %15 : vector<8x512xf32>
    %17 = math.tanh %16 : vector<8x512xf32>
    %18 = vector.extract_strided_slice %17 {offsets = [0, 0], sizes = [8, 128], strides = [1, 1]} : vector<8x512xf32> to vector<8x128xf32>
    %cst_13 = arith.constant 5.000000e-01 : f32
    %19 = vector.broadcast %cst_13 : f32 to vector<8x128xf32>
    %20 = arith.mulf %19, %18 : vector<8x128xf32>
    %cst_14 = arith.constant 5.000000e-01 : f32
    %21 = vector.broadcast %cst_14 : f32 to vector<8x128xf32>
    %22 = arith.addf %20, %21 : vector<8x128xf32>
    %23 = vector.extract_strided_slice %17 {offsets = [0, 128], sizes = [8, 128], strides = [1, 1]} : vector<8x512xf32> to vector<8x128xf32>
    %cst_15 = arith.constant 5.000000e-01 : f32
    %24 = vector.broadcast %cst_15 : f32 to vector<8x128xf32>
    %25 = arith.mulf %24, %23 : vector<8x128xf32>
    %cst_16 = arith.constant 5.000000e-01 : f32
    %26 = vector.broadcast %cst_16 : f32 to vector<8x128xf32>
    %27 = arith.addf %25, %26 : vector<8x128xf32>
    %28 = vector.extract_strided_slice %17 {offsets = [0, 256], sizes = [8, 128], strides = [1, 1]} : vector<8x512xf32> to vector<8x128xf32>
    %29 = vector.extract_strided_slice %17 {offsets = [0, 384], sizes = [8, 128], strides = [1, 1]} : vector<8x512xf32> to vector<8x128xf32>
    %cst_17 = arith.constant 5.000000e-01 : f32
    %30 = vector.broadcast %cst_17 : f32 to vector<8x128xf32>
    %31 = arith.mulf %30, %29 : vector<8x128xf32>
    %cst_18 = arith.constant 5.000000e-01 : f32
    %32 = vector.broadcast %cst_18 : f32 to vector<8x128xf32>
    %33 = arith.addf %31, %32 : vector<8x128xf32>
    %34 = arith.mulf %27, %8 : vector<8x128xf32>
    %35 = arith.mulf %22, %28 : vector<8x128xf32>
    %36 = arith.addf %34, %35 : vector<8x128xf32>
    %37 = math.tanh %36 : vector<8x128xf32>
    %38 = arith.mulf %33, %37 : vector<8x128xf32>
    %c1_i32 = arith.constant 1 : i32
    %c8_i32_19 = arith.constant 8 : i32
    %39 = arith.muli %c1_i32, %c8_i32_19 : i32
    %40 = tpu.assume_multiple %39, 8 : i32
    %41 = arith.index_cast %40 : i32 to index
    %c0_20 = arith.constant 0 : index
    %42 = vector.load %arg7[%41, %c0_20] : memref<64x512xf32, #tpu.memory_space<vmem>>, vector<8x512xf32>
    %43 = arith.truncf %38 : vector<8x128xf32> to vector<8x128xbf16>
    %c0_21 = arith.constant 0 : index
    %c0_22 = arith.constant 0 : index
    %44 = vector.load %arg8[%c0_21, %c0_22] : memref<128x512xbf16, #tpu.memory_space<vmem>>, vector<128x512xbf16>
    %cst_23 = arith.constant dense<0.000000e+00> : vector<8x512xf32>
    %45 = tpu.matmul %43, %44, %cst_23 {dimension_numbers = #tpu.dot_dimension_numbers<[1], [0], [0], [1], [0, 0, 1, 1], [], []>} : vector<8x128xbf16>, vector<128x512xbf16>, vector<8x512xf32> -> vector<8x512xf32>
    %46 = arith.addf %42, %45 : vector<8x512xf32>
    %47 = math.tanh %46 : vector<8x512xf32>
    %48 = vector.extract_strided_slice %47 {offsets = [0, 0], sizes = [8, 128], strides = [1, 1]} : vector<8x512xf32> to vector<8x128xf32>
    %cst_24 = arith.constant 5.000000e-01 : f32
    %49 = vector.broadcast %cst_24 : f32 to vector<8x128xf32>
    %50 = arith.mulf %49, %48 : vector<8x128xf32>
    %cst_25 = arith.constant 5.000000e-01 : f32
    %51 = vector.broadcast %cst_25 : f32 to vector<8x128xf32>
    %52 = arith.addf %50, %51 : vector<8x128xf32>
    %53 = vector.extract_strided_slice %47 {offsets = [0, 128], sizes = [8, 128], strides = [1, 1]} : vector<8x512xf32> to vector<8x128xf32>
    %cst_26 = arith.constant 5.000000e-01 : f32
    %54 = vector.broadcast %cst_26 : f32 to vector<8x128xf32>
    %55 = arith.mulf %54, %53 : vector<8x128xf32>
    %cst_27 = arith.constant 5.000000e-01 : f32
    %56 = vector.broadcast %cst_27 : f32 to vector<8x128xf32>
    %57 = arith.addf %55, %56 : vector<8x128xf32>
    %58 = vector.extract_strided_slice %47 {offsets = [0, 256], sizes = [8, 128], strides = [1, 1]} : vector<8x512xf32> to vector<8x128xf32>
    %59 = vector.extract_strided_slice %47 {offsets = [0, 384], sizes = [8, 128], strides = [1, 1]} : vector<8x512xf32> to vector<8x128xf32>
    %cst_28 = arith.constant 5.000000e-01 : f32
    %60 = vector.broadcast %cst_28 : f32 to vector<8x128xf32>
    %61 = arith.mulf %60, %59 : vector<8x128xf32>
    %cst_29 = arith.constant 5.000000e-01 : f32
    %62 = vector.broadcast %cst_29 : f32 to vector<8x128xf32>
    %63 = arith.addf %61, %62 : vector<8x128xf32>
    %64 = arith.mulf %57, %36 : vector<8x128xf32>
    %65 = arith.mulf %52, %58 : vector<8x128xf32>
    %66 = arith.addf %64, %65 : vector<8x128xf32>
    %67 = math.tanh %66 : vector<8x128xf32>
    %68 = arith.mulf %63, %67 : vector<8x128xf32>
    %c2_i32 = arith.constant 2 : i32
    %c8_i32_30 = arith.constant 8 : i32
    %69 = arith.muli %c2_i32, %c8_i32_30 : i32
    %70 = tpu.assume_multiple %69, 8 : i32
    %71 = arith.index_cast %70 : i32 to index
    %c0_31 = arith.constant 0 : index
    %72 = vector.load %arg7[%71, %c0_31] : memref<64x512xf32, #tpu.memory_space<vmem>>, vector<8x512xf32>
    %73 = arith.truncf %68 : vector<8x128xf32> to vector<8x128xbf16>
    %c0_32 = arith.constant 0 : index
    %c0_33 = arith.constant 0 : index
    %74 = vector.load %arg8[%c0_32, %c0_33] : memref<128x512xbf16, #tpu.memory_space<vmem>>, vector<128x512xbf16>
    %cst_34 = arith.constant dense<0.000000e+00> : vector<8x512xf32>
    %75 = tpu.matmul %73, %74, %cst_34 {dimension_numbers = #tpu.dot_dimension_numbers<[1], [0], [0], [1], [0, 0, 1, 1], [], []>} : vector<8x128xbf16>, vector<128x512xbf16>, vector<8x512xf32> -> vector<8x512xf32>
    %76 = arith.addf %72, %75 : vector<8x512xf32>
    %77 = math.tanh %76 : vector<8x512xf32>
    %78 = vector.extract_strided_slice %77 {offsets = [0, 0], sizes = [8, 128], strides = [1, 1]} : vector<8x512xf32> to vector<8x128xf32>
    %cst_35 = arith.constant 5.000000e-01 : f32
    %79 = vector.broadcast %cst_35 : f32 to vector<8x128xf32>
    %80 = arith.mulf %79, %78 : vector<8x128xf32>
    %cst_36 = arith.constant 5.000000e-01 : f32
    %81 = vector.broadcast %cst_36 : f32 to vector<8x128xf32>
    %82 = arith.addf %80, %81 : vector<8x128xf32>
    %83 = vector.extract_strided_slice %77 {offsets = [0, 128], sizes = [8, 128], strides = [1, 1]} : vector<8x512xf32> to vector<8x128xf32>
    %cst_37 = arith.constant 5.000000e-01 : f32
    %84 = vector.broadcast %cst_37 : f32 to vector<8x128xf32>
    %85 = arith.mulf %84, %83 : vector<8x128xf32>
    %cst_38 = arith.constant 5.000000e-01 : f32
    %86 = vector.broadcast %cst_38 : f32 to vector<8x128xf32>
    %87 = arith.addf %85, %86 : vector<8x128xf32>
    %88 = vector.extract_strided_slice %77 {offsets = [0, 256], sizes = [8, 128], strides = [1, 1]} : vector<8x512xf32> to vector<8x128xf32>
    %89 = vector.extract_strided_slice %77 {offsets = [0, 384], sizes = [8, 128], strides = [1, 1]} : vector<8x512xf32> to vector<8x128xf32>
    %cst_39 = arith.constant 5.000000e-01 : f32
    %90 = vector.broadcast %cst_39 : f32 to vector<8x128xf32>
    %91 = arith.mulf %90, %89 : vector<8x128xf32>
    %cst_40 = arith.constant 5.000000e-01 : f32
    %92 = vector.broadcast %cst_40 : f32 to vector<8x128xf32>
    %93 = arith.addf %91, %92 : vector<8x128xf32>
    %94 = arith.mulf %87, %66 : vector<8x128xf32>
    %95 = arith.mulf %82, %88 : vector<8x128xf32>
    %96 = arith.addf %94, %95 : vector<8x128xf32>
    %97 = math.tanh %96 : vector<8x128xf32>
    %98 = arith.mulf %93, %97 : vector<8x128xf32>
    %c3_i32 = arith.constant 3 : i32
    %c8_i32_41 = arith.constant 8 : i32
    %99 = arith.muli %c3_i32, %c8_i32_41 : i32
    %100 = tpu.assume_multiple %99, 8 : i32
    %101 = arith.index_cast %100 : i32 to index
    %c0_42 = arith.constant 0 : index
    %102 = vector.load %arg7[%101, %c0_42] : memref<64x512xf32, #tpu.memory_space<vmem>>, vector<8x512xf32>
    %103 = arith.truncf %98 : vector<8x128xf32> to vector<8x128xbf16>
    %c0_43 = arith.constant 0 : index
    %c0_44 = arith.constant 0 : index
    %104 = vector.load %arg8[%c0_43, %c0_44] : memref<128x512xbf16, #tpu.memory_space<vmem>>, vector<128x512xbf16>
    %cst_45 = arith.constant dense<0.000000e+00> : vector<8x512xf32>
    %105 = tpu.matmul %103, %104, %cst_45 {dimension_numbers = #tpu.dot_dimension_numbers<[1], [0], [0], [1], [0, 0, 1, 1], [], []>} : vector<8x128xbf16>, vector<128x512xbf16>, vector<8x512xf32> -> vector<8x512xf32>
    %106 = arith.addf %102, %105 : vector<8x512xf32>
    %107 = math.tanh %106 : vector<8x512xf32>
    %108 = vector.extract_strided_slice %107 {offsets = [0, 0], sizes = [8, 128], strides = [1, 1]} : vector<8x512xf32> to vector<8x128xf32>
    %cst_46 = arith.constant 5.000000e-01 : f32
    %109 = vector.broadcast %cst_46 : f32 to vector<8x128xf32>
    %110 = arith.mulf %109, %108 : vector<8x128xf32>
    %cst_47 = arith.constant 5.000000e-01 : f32
    %111 = vector.broadcast %cst_47 : f32 to vector<8x128xf32>
    %112 = arith.addf %110, %111 : vector<8x128xf32>
    %113 = vector.extract_strided_slice %107 {offsets = [0, 128], sizes = [8, 128], strides = [1, 1]} : vector<8x512xf32> to vector<8x128xf32>
    %cst_48 = arith.constant 5.000000e-01 : f32
    %114 = vector.broadcast %cst_48 : f32 to vector<8x128xf32>
    %115 = arith.mulf %114, %113 : vector<8x128xf32>
    %cst_49 = arith.constant 5.000000e-01 : f32
    %116 = vector.broadcast %cst_49 : f32 to vector<8x128xf32>
    %117 = arith.addf %115, %116 : vector<8x128xf32>
    %118 = vector.extract_strided_slice %107 {offsets = [0, 256], sizes = [8, 128], strides = [1, 1]} : vector<8x512xf32> to vector<8x128xf32>
    %119 = vector.extract_strided_slice %107 {offsets = [0, 384], sizes = [8, 128], strides = [1, 1]} : vector<8x512xf32> to vector<8x128xf32>
    %cst_50 = arith.constant 5.000000e-01 : f32
    %120 = vector.broadcast %cst_50 : f32 to vector<8x128xf32>
    %121 = arith.mulf %120, %119 : vector<8x128xf32>
    %cst_51 = arith.constant 5.000000e-01 : f32
    %122 = vector.broadcast %cst_51 : f32 to vector<8x128xf32>
    %123 = arith.addf %121, %122 : vector<8x128xf32>
    %124 = arith.mulf %117, %96 : vector<8x128xf32>
    %125 = arith.mulf %112, %118 : vector<8x128xf32>
    %126 = arith.addf %124, %125 : vector<8x128xf32>
    %127 = math.tanh %126 : vector<8x128xf32>
    %128 = arith.mulf %123, %127 : vector<8x128xf32>
    %c4_i32 = arith.constant 4 : i32
    %c8_i32_52 = arith.constant 8 : i32
    %129 = arith.muli %c4_i32, %c8_i32_52 : i32
    %130 = tpu.assume_multiple %129, 8 : i32
    %131 = arith.index_cast %130 : i32 to index
    %c0_53 = arith.constant 0 : index
    %132 = vector.load %arg7[%131, %c0_53] : memref<64x512xf32, #tpu.memory_space<vmem>>, vector<8x512xf32>
    %133 = arith.truncf %128 : vector<8x128xf32> to vector<8x128xbf16>
    %c0_54 = arith.constant 0 : index
    %c0_55 = arith.constant 0 : index
    %134 = vector.load %arg8[%c0_54, %c0_55] : memref<128x512xbf16, #tpu.memory_space<vmem>>, vector<128x512xbf16>
    %cst_56 = arith.constant dense<0.000000e+00> : vector<8x512xf32>
    %135 = tpu.matmul %133, %134, %cst_56 {dimension_numbers = #tpu.dot_dimension_numbers<[1], [0], [0], [1], [0, 0, 1, 1], [], []>} : vector<8x128xbf16>, vector<128x512xbf16>, vector<8x512xf32> -> vector<8x512xf32>
    %136 = arith.addf %132, %135 : vector<8x512xf32>
    %137 = math.tanh %136 : vector<8x512xf32>
    %138 = vector.extract_strided_slice %137 {offsets = [0, 0], sizes = [8, 128], strides = [1, 1]} : vector<8x512xf32> to vector<8x128xf32>
    %cst_57 = arith.constant 5.000000e-01 : f32
    %139 = vector.broadcast %cst_57 : f32 to vector<8x128xf32>
    %140 = arith.mulf %139, %138 : vector<8x128xf32>
    %cst_58 = arith.constant 5.000000e-01 : f32
    %141 = vector.broadcast %cst_58 : f32 to vector<8x128xf32>
    %142 = arith.addf %140, %141 : vector<8x128xf32>
    %143 = vector.extract_strided_slice %137 {offsets = [0, 128], sizes = [8, 128], strides = [1, 1]} : vector<8x512xf32> to vector<8x128xf32>
    %cst_59 = arith.constant 5.000000e-01 : f32
    %144 = vector.broadcast %cst_59 : f32 to vector<8x128xf32>
    %145 = arith.mulf %144, %143 : vector<8x128xf32>
    %cst_60 = arith.constant 5.000000e-01 : f32
    %146 = vector.broadcast %cst_60 : f32 to vector<8x128xf32>
    %147 = arith.addf %145, %146 : vector<8x128xf32>
    %148 = vector.extract_strided_slice %137 {offsets = [0, 256], sizes = [8, 128], strides = [1, 1]} : vector<8x512xf32> to vector<8x128xf32>
    %149 = vector.extract_strided_slice %137 {offsets = [0, 384], sizes = [8, 128], strides = [1, 1]} : vector<8x512xf32> to vector<8x128xf32>
    %cst_61 = arith.constant 5.000000e-01 : f32
    %150 = vector.broadcast %cst_61 : f32 to vector<8x128xf32>
    %151 = arith.mulf %150, %149 : vector<8x128xf32>
    %cst_62 = arith.constant 5.000000e-01 : f32
    %152 = vector.broadcast %cst_62 : f32 to vector<8x128xf32>
    %153 = arith.addf %151, %152 : vector<8x128xf32>
    %154 = arith.mulf %147, %126 : vector<8x128xf32>
    %155 = arith.mulf %142, %148 : vector<8x128xf32>
    %156 = arith.addf %154, %155 : vector<8x128xf32>
    %157 = math.tanh %156 : vector<8x128xf32>
    %158 = arith.mulf %153, %157 : vector<8x128xf32>
    %c5_i32 = arith.constant 5 : i32
    %c8_i32_63 = arith.constant 8 : i32
    %159 = arith.muli %c5_i32, %c8_i32_63 : i32
    %160 = tpu.assume_multiple %159, 8 : i32
    %161 = arith.index_cast %160 : i32 to index
    %c0_64 = arith.constant 0 : index
    %162 = vector.load %arg7[%161, %c0_64] : memref<64x512xf32, #tpu.memory_space<vmem>>, vector<8x512xf32>
    %163 = arith.truncf %158 : vector<8x128xf32> to vector<8x128xbf16>
    %c0_65 = arith.constant 0 : index
    %c0_66 = arith.constant 0 : index
    %164 = vector.load %arg8[%c0_65, %c0_66] : memref<128x512xbf16, #tpu.memory_space<vmem>>, vector<128x512xbf16>
    %cst_67 = arith.constant dense<0.000000e+00> : vector<8x512xf32>
    %165 = tpu.matmul %163, %164, %cst_67 {dimension_numbers = #tpu.dot_dimension_numbers<[1], [0], [0], [1], [0, 0, 1, 1], [], []>} : vector<8x128xbf16>, vector<128x512xbf16>, vector<8x512xf32> -> vector<8x512xf32>
    %166 = arith.addf %162, %165 : vector<8x512xf32>
    %167 = math.tanh %166 : vector<8x512xf32>
    %168 = vector.extract_strided_slice %167 {offsets = [0, 0], sizes = [8, 128], strides = [1, 1]} : vector<8x512xf32> to vector<8x128xf32>
    %cst_68 = arith.constant 5.000000e-01 : f32
    %169 = vector.broadcast %cst_68 : f32 to vector<8x128xf32>
    %170 = arith.mulf %169, %168 : vector<8x128xf32>
    %cst_69 = arith.constant 5.000000e-01 : f32
    %171 = vector.broadcast %cst_69 : f32 to vector<8x128xf32>
    %172 = arith.addf %170, %171 : vector<8x128xf32>
    %173 = vector.extract_strided_slice %167 {offsets = [0, 128], sizes = [8, 128], strides = [1, 1]} : vector<8x512xf32> to vector<8x128xf32>
    %cst_70 = arith.constant 5.000000e-01 : f32
    %174 = vector.broadcast %cst_70 : f32 to vector<8x128xf32>
    %175 = arith.mulf %174, %173 : vector<8x128xf32>
    %cst_71 = arith.constant 5.000000e-01 : f32
    %176 = vector.broadcast %cst_71 : f32 to vector<8x128xf32>
    %177 = arith.addf %175, %176 : vector<8x128xf32>
    %178 = vector.extract_strided_slice %167 {offsets = [0, 256], sizes = [8, 128], strides = [1, 1]} : vector<8x512xf32> to vector<8x128xf32>
    %179 = vector.extract_strided_slice %167 {offsets = [0, 384], sizes = [8, 128], strides = [1, 1]} : vector<8x512xf32> to vector<8x128xf32>
    %cst_72 = arith.constant 5.000000e-01 : f32
    %180 = vector.broadcast %cst_72 : f32 to vector<8x128xf32>
    %181 = arith.mulf %180, %179 : vector<8x128xf32>
    %cst_73 = arith.constant 5.000000e-01 : f32
    %182 = vector.broadcast %cst_73 : f32 to vector<8x128xf32>
    %183 = arith.addf %181, %182 : vector<8x128xf32>
    %184 = arith.mulf %177, %156 : vector<8x128xf32>
    %185 = arith.mulf %172, %178 : vector<8x128xf32>
    %186 = arith.addf %184, %185 : vector<8x128xf32>
    %187 = math.tanh %186 : vector<8x128xf32>
    %188 = arith.mulf %183, %187 : vector<8x128xf32>
    %c6_i32 = arith.constant 6 : i32
    %c8_i32_74 = arith.constant 8 : i32
    %189 = arith.muli %c6_i32, %c8_i32_74 : i32
    %190 = tpu.assume_multiple %189, 8 : i32
    %191 = arith.index_cast %190 : i32 to index
    %c0_75 = arith.constant 0 : index
    %192 = vector.load %arg7[%191, %c0_75] : memref<64x512xf32, #tpu.memory_space<vmem>>, vector<8x512xf32>
    %193 = arith.truncf %188 : vector<8x128xf32> to vector<8x128xbf16>
    %c0_76 = arith.constant 0 : index
    %c0_77 = arith.constant 0 : index
    %194 = vector.load %arg8[%c0_76, %c0_77] : memref<128x512xbf16, #tpu.memory_space<vmem>>, vector<128x512xbf16>
    %cst_78 = arith.constant dense<0.000000e+00> : vector<8x512xf32>
    %195 = tpu.matmul %193, %194, %cst_78 {dimension_numbers = #tpu.dot_dimension_numbers<[1], [0], [0], [1], [0, 0, 1, 1], [], []>} : vector<8x128xbf16>, vector<128x512xbf16>, vector<8x512xf32> -> vector<8x512xf32>
    %196 = arith.addf %192, %195 : vector<8x512xf32>
    %197 = math.tanh %196 : vector<8x512xf32>
    %198 = vector.extract_strided_slice %197 {offsets = [0, 0], sizes = [8, 128], strides = [1, 1]} : vector<8x512xf32> to vector<8x128xf32>
    %cst_79 = arith.constant 5.000000e-01 : f32
    %199 = vector.broadcast %cst_79 : f32 to vector<8x128xf32>
    %200 = arith.mulf %199, %198 : vector<8x128xf32>
    %cst_80 = arith.constant 5.000000e-01 : f32
    %201 = vector.broadcast %cst_80 : f32 to vector<8x128xf32>
    %202 = arith.addf %200, %201 : vector<8x128xf32>
    %203 = vector.extract_strided_slice %197 {offsets = [0, 128], sizes = [8, 128], strides = [1, 1]} : vector<8x512xf32> to vector<8x128xf32>
    %cst_81 = arith.constant 5.000000e-01 : f32
    %204 = vector.broadcast %cst_81 : f32 to vector<8x128xf32>
    %205 = arith.mulf %204, %203 : vector<8x128xf32>
    %cst_82 = arith.constant 5.000000e-01 : f32
    %206 = vector.broadcast %cst_82 : f32 to vector<8x128xf32>
    %207 = arith.addf %205, %206 : vector<8x128xf32>
    %208 = vector.extract_strided_slice %197 {offsets = [0, 256], sizes = [8, 128], strides = [1, 1]} : vector<8x512xf32> to vector<8x128xf32>
    %209 = vector.extract_strided_slice %197 {offsets = [0, 384], sizes = [8, 128], strides = [1, 1]} : vector<8x512xf32> to vector<8x128xf32>
    %cst_83 = arith.constant 5.000000e-01 : f32
    %210 = vector.broadcast %cst_83 : f32 to vector<8x128xf32>
    %211 = arith.mulf %210, %209 : vector<8x128xf32>
    %cst_84 = arith.constant 5.000000e-01 : f32
    %212 = vector.broadcast %cst_84 : f32 to vector<8x128xf32>
    %213 = arith.addf %211, %212 : vector<8x128xf32>
    %214 = arith.mulf %207, %186 : vector<8x128xf32>
    %215 = arith.mulf %202, %208 : vector<8x128xf32>
    %216 = arith.addf %214, %215 : vector<8x128xf32>
    %217 = math.tanh %216 : vector<8x128xf32>
    %218 = arith.mulf %213, %217 : vector<8x128xf32>
    %c7_i32 = arith.constant 7 : i32
    %c8_i32_85 = arith.constant 8 : i32
    %219 = arith.muli %c7_i32, %c8_i32_85 : i32
    %220 = tpu.assume_multiple %219, 8 : i32
    %221 = arith.index_cast %220 : i32 to index
    %c0_86 = arith.constant 0 : index
    %222 = vector.load %arg7[%221, %c0_86] : memref<64x512xf32, #tpu.memory_space<vmem>>, vector<8x512xf32>
    %223 = arith.truncf %218 : vector<8x128xf32> to vector<8x128xbf16>
    %c0_87 = arith.constant 0 : index
    %c0_88 = arith.constant 0 : index
    %224 = vector.load %arg8[%c0_87, %c0_88] : memref<128x512xbf16, #tpu.memory_space<vmem>>, vector<128x512xbf16>
    %cst_89 = arith.constant dense<0.000000e+00> : vector<8x512xf32>
    %225 = tpu.matmul %223, %224, %cst_89 {dimension_numbers = #tpu.dot_dimension_numbers<[1], [0], [0], [1], [0, 0, 1, 1], [], []>} : vector<8x128xbf16>, vector<128x512xbf16>, vector<8x512xf32> -> vector<8x512xf32>
    %226 = arith.addf %222, %225 : vector<8x512xf32>
    %227 = math.tanh %226 : vector<8x512xf32>
    %228 = vector.extract_strided_slice %227 {offsets = [0, 0], sizes = [8, 128], strides = [1, 1]} : vector<8x512xf32> to vector<8x128xf32>
    %cst_90 = arith.constant 5.000000e-01 : f32
    %229 = vector.broadcast %cst_90 : f32 to vector<8x128xf32>
    %230 = arith.mulf %229, %228 : vector<8x128xf32>
    %cst_91 = arith.constant 5.000000e-01 : f32
    %231 = vector.broadcast %cst_91 : f32 to vector<8x128xf32>
    %232 = arith.addf %230, %231 : vector<8x128xf32>
    %233 = vector.extract_strided_slice %227 {offsets = [0, 128], sizes = [8, 128], strides = [1, 1]} : vector<8x512xf32> to vector<8x128xf32>
    %cst_92 = arith.constant 5.000000e-01 : f32
    %234 = vector.broadcast %cst_92 : f32 to vector<8x128xf32>
    %235 = arith.mulf %234, %233 : vector<8x128xf32>
    %cst_93 = arith.constant 5.000000e-01 : f32
    %236 = vector.broadcast %cst_93 : f32 to vector<8x128xf32>
    %237 = arith.addf %235, %236 : vector<8x128xf32>
    %238 = vector.extract_strided_slice %227 {offsets = [0, 256], sizes = [8, 128], strides = [1, 1]} : vector<8x512xf32> to vector<8x128xf32>
    %239 = vector.extract_strided_slice %227 {offsets = [0, 384], sizes = [8, 128], strides = [1, 1]} : vector<8x512xf32> to vector<8x128xf32>
    %cst_94 = arith.constant 5.000000e-01 : f32
    %240 = vector.broadcast %cst_94 : f32 to vector<8x128xf32>
    %241 = arith.mulf %240, %239 : vector<8x128xf32>
    %cst_95 = arith.constant 5.000000e-01 : f32
    %242 = vector.broadcast %cst_95 : f32 to vector<8x128xf32>
    %243 = arith.addf %241, %242 : vector<8x128xf32>
    %244 = arith.mulf %237, %216 : vector<8x128xf32>
    %245 = arith.mulf %232, %238 : vector<8x128xf32>
    %246 = arith.addf %244, %245 : vector<8x128xf32>
    %247 = math.tanh %246 : vector<8x128xf32>
    %248 = arith.mulf %243, %247 : vector<8x128xf32>
    %c8_i32_96 = arith.constant 8 : i32
    %c0_97 = arith.constant 0 : index
    %c0_98 = arith.constant 0 : index
    %249 = vector.load %arg4[%c0_97, %c0_98] : memref<2x128xf32, #tpu.memory_space<vmem>>, vector<1x128xf32>
    %250 = vector.broadcast %249 : vector<1x128xf32> to vector<8x128xf32>
    %251 = arith.mulf %248, %250 : vector<8x128xf32>
    %cst_99 = arith.constant dense<0.000000e+00> : vector<8xf32>
    %252 = vector.multi_reduction <add>, %251, %cst_99 [1] : vector<8x128xf32> to vector<8xf32>
    %253 = vector.shape_cast %252 : vector<8xf32> to vector<8x1xf32>
    %c1 = arith.constant 1 : index
    %c0_100 = arith.constant 0 : index
    %254 = vector.load %arg4[%c1, %c0_100] : memref<2x128xf32, #tpu.memory_space<vmem>>, vector<1x128xf32>
    %255 = vector.broadcast %254 : vector<1x128xf32> to vector<8x128xf32>
    %256 = arith.mulf %246, %255 : vector<8x128xf32>
    %cst_101 = arith.constant dense<0.000000e+00> : vector<8xf32>
    %257 = vector.multi_reduction <add>, %256, %cst_101 [1] : vector<8x128xf32> to vector<8xf32>
    %258 = vector.shape_cast %257 : vector<8xf32> to vector<8x1xf32>
    %259 = arith.addf %253, %258 : vector<8x1xf32>
    %c0_102 = arith.constant 0 : index
    %c0_103 = arith.constant 0 : index
    %260 = memref.load %arg5[%c0_102, %c0_103] : memref<1x1xf32, #tpu.memory_space<smem>>
    %261 = vector.broadcast %260 : f32 to vector<8x1xf32>
    %262 = arith.addf %259, %261 : vector<8x1xf32>
    %263 = vector.extract_strided_slice %262 {offsets = [0, 0], sizes = [2, 1], strides = [1, 1]} : vector<8x1xf32> to vector<2x1xf32>
    %c0_104 = arith.constant 0 : index
    %c0_105 = arith.constant 0 : index
    %264 = vector.load %arg6[%c0_104, %c0_105] : memref<2x1xf32, #tpu.memory_space<vmem>>, vector<2x1xf32>
    tpu.vector_store %arg6[%c0_104, %c0_105], %263 {strides = array<i32>} : memref<2x1xf32, #tpu.memory_space<vmem>>, vector<2x1xf32>,
    return
  }
}

</mosaic_0001>

<llo_original>
// kernel: tpu_custom_call.1
$region0: #{tpu_custom_call.1}
  #allocation0 [shape = 'u32[]', space=smem, size = 0x4, offset = 0x4, fixed_abs, tag = 'smem constant byte address 0x4 - core index']
  #allocation1 [shape = 'u32[144,128]{1,0:T(1,128)}', space=vmem, size = 0x12000, scoped, tag = 'internal scratch']
  #allocation2 [shape = 'f32[64,512]{1,0:T(8,128)}', space=vmem, size = 0x20000, scoped, tag = 'scratch operand']
  #allocation3 [shape = 'bf16[128,512]{1,0:T(16,128)(2,1)}', space=vmem, size = 0x20000, scoped, tag = 'scratch operand']
  #allocation4 [shape = 's32[1]{0}', space=sflag, size = 0x4, scoped, tag = 'scratch operand']
  #allocation5 [shape = 'f32[1,1]{1,0:T(1,128)S(6)}', space=smem, size = 0x200, scoped, tag = 'scoped memory for tpu_custom_call.1']
  #allocation6 [shape = 's32[]', space=sflag, size = 0x4, offset = 0, fixed_abs, tag = 'sflag constant byte address 0x0 - dummy sync flag']
  %s0 = inlined_call_operand.vmem [shape: f32[64,16], index: 0, kind: input, shape index: {}]
  %s1 = inlined_call_operand.vmem [shape: f32[16,512], index: 1, kind: input, shape index: {}]
  %s2 = inlined_call_operand.hbm [shape: bf16[128,512], index: 2, kind: input, shape index: {}]
  %s3 = inlined_call_operand.vmem [shape: f32[1,512], index: 3, kind: input, shape index: {}]
  %s4 = inlined_call_operand.vmem [shape: f32[2,128], index: 4, kind: input, shape index: {}]
  %s5 = inlined_call_operand.<no memory space> [shape: f32[1,1], index: 5, kind: input, shape index: {}]
  %s6 = inlined_call_operand.vmem [shape: f32[2,1], index: 6, kind: output, shape index: {}]
  %s7 = sld [smem:[#allocation0]]
  $region30: #{tpu_custom_call.1} parent=0
    _
  %s9 = ssub.s32 1, %s7
  %s10 = scalar_select 0, %s9, %s7
  %11 = sst [smem:[#allocation5]] %s5
  $region1: #{tpu_custom_call.1} parent=0
    #allocation7 [shape = 'u32[9]{0}', space=smem, size = 0x24, scoped, tag = 'DMA stride descriptor']
    // Predicated region
    $region2: #{tpu_custom_call.1} parent=1 // pred_check
      _
    $region3: #{tpu_custom_call.1} parent=1 // pred_check_branch
      %13 = sbr.rel (0) target = $region5
    $region4: #{tpu_custom_call.1} parent=1 // pred_region
      _
    $region5: #{tpu_custom_call.1} parent=1 // pred_fallthru
      _
    // Predicated region
    $region6: #{tpu_custom_call.1} parent=1 // pred_check
      _
    $region7: #{tpu_custom_call.1} parent=1 // pred_check_branch
      %15 = sbr.rel (0) target = $region9
    $region8: #{tpu_custom_call.1} parent=1 // pred_region
      _
    $region9: #{tpu_custom_call.1} parent=1 // pred_fallthru
      _
    // Predicated region
    $region10: #{tpu_custom_call.1} parent=1 // pred_check
      _
    $region11: #{tpu_custom_call.1} parent=1 // pred_check_branch
      %17 = sbr.rel (0) target = $region13
    $region12: #{tpu_custom_call.1} parent=1 // pred_region
      _
    $region13: #{tpu_custom_call.1} parent=1 // pred_fallthru
      _
    // Predicated region
    $region14: #{tpu_custom_call.1} parent=1 // pred_check
      _
    $region15: #{tpu_custom_call.1} parent=1 // pred_check_branch
      %19 = sbr.rel (0) target = $region17
    $region16: #{tpu_custom_call.1} parent=1 // pred_region
      _
    $region17: #{tpu_custom_call.1} parent=1 // pred_fallthru
      _
    // Predicated region
    $region18: #{tpu_custom_call.1} parent=1 // pred_check
      _
    $region19: #{tpu_custom_call.1} parent=1 // pred_check_branch
      %21 = sbr.rel (0) target = $region21
    $region20: #{tpu_custom_call.1} parent=1 // pred_region
      _
    $region21: #{tpu_custom_call.1} parent=1 // pred_fallthru
      _
    %s24 = sshll.u32 1, 14
    %s25 = sxor.u32 4294967295, %s24
    %s27 = sld [smem:[#allocation0]]
    %s28 = sadd.s32 2, %s27
    %s30 = sshll.u32 7, 26
    %s31 = sxor.u32 4294967295, %s30
    %s32 = sand.u32 0, %s31
    %s33 = sshll.u32 %s28, 26
    %s34 = sor.u32 %s32, %s33
    %s35 = sshll.u32 [#allocation3], 4
    %s36 = int_to_ptr.vmem [resolvable:$true] %s35
    %39 = sst [smem:[#allocation7]] 512
    %s40 = scalar_lea.smem [#allocation7], 1
    %41 = sst [smem:[%s40]] 512
    %s42 = scalar_lea.smem [#allocation7], 2
    %43 = sst [smem:[%s42]] 4
    %s44 = scalar_lea.smem [#allocation7], 3
    %45 = sst [smem:[%s44]] 64
    %s46 = scalar_lea.smem [#allocation7], 4
    %47 = sst [smem:[%s46]] 128
    %s48 = scalar_lea.smem [#allocation7], 5
    %49 = sst [smem:[%s48]] 2
    %s50 = scalar_lea.smem [#allocation7], 6
    %51 = sst [smem:[%s50]] 256
    %s52 = scalar_lea.smem [#allocation7], 7
    %53 = sst [smem:[%s52]] 64
    %s54 = scalar_lea.smem [#allocation7], 8
    %55 = sst [smem:[%s54]] 4
    %57 = dma.general %s2, 4096, %s36, [#allocation4], [#allocation6], [#allocation7], %s34, 0
    %v58 = vld [vmem:[%s0] sm:$0xff]
    %v59 = vld [vmem:[%s0 + $0x8] sm:$0xff]
    %v60 = vld [vmem:[%s0 + $0x10] sm:$0xff]
    %v61 = vld [vmem:[%s0 + $0x18] sm:$0xff]
    %v62 = vld [vmem:[%s0 + $0x20] sm:$0xff]
    %v63 = vld [vmem:[%s0 + $0x28] sm:$0xff]
    %v64 = vld [vmem:[%s0 + $0x30] sm:$0xff]
    %v65 = vld [vmem:[%s0 + $0x38] sm:$0xff]
    %v66 = vld [vmem:[%s1] sm:$0xff]
    %v67 = vld [vmem:[%s1 + $0x8] sm:$0xff]
    %v68 = vld [vmem:[%s1 + $0x10] sm:$0xff]
    %v69 = vld [vmem:[%s1 + $0x18] sm:$0xff]
    %v70 = vld [vmem:[%s1 + $0x20] sm:$0xff]
    %v71 = vld [vmem:[%s1 + $0x28] sm:$0xff]
    %v72 = vld [vmem:[%s1 + $0x30] sm:$0xff]
    %v73 = vld [vmem:[%s1 + $0x38] sm:$0xff]
    %v74 = vld [vmem:[%s3] sm:$0xf]
    %v76 = vlaneseq
    %v77 = vshrl.u32 %v76, 7
    %v78 = vsub.s32 0, %v77
    %v79 = vrot.slane %v74, %v78
    %v80 = vlaneseq
    %v81 = vshrl.u32 %v80, 7
    %v82 = vsub.s32 1, %v81
    %v83 = vrot.slane %v74, %v82
    %v84 = vlaneseq
    %v85 = vshrl.u32 %v84, 7
    %v86 = vsub.s32 2, %v85
    %v87 = vrot.slane %v74, %v86
    %v88 = vlaneseq
    %v89 = vshrl.u32 %v88, 7
    %v90 = vsub.s32 3, %v89
    %v91 = vrot.slane %v74, %v90
    %vm96 = vcmask 130048
    %v98 = vsel %vm96, %v58, 0
    %v101 = vsel %vm96, %v59, 0
    %v104 = vsel %vm96, %v60, 0
    %v107 = vsel %vm96, %v61, 0
    %v110 = vsel %vm96, %v62, 0
    %v113 = vsel %vm96, %v63, 0
    %v116 = vsel %vm96, %v64, 0
    %v119 = vsel %vm96, %v65, 0
    %121 = vmatprep.subr.mxu0 %v67
    %122 = vmatpush1.msra.mxu0 %v66
    %123 = vmatprep.subr.mxu0 %v71
    %124 = vmatpush1.msra.mxu0 %v70
    %125 = vmatprep.subr.mxu0 0.0
    %126 = vmatpush1.msra.mxu0 0.0
    %127 = vmatprep.subr.mxu0 0.0
    %128 = vmatpush1.msra.mxu0 0.0
    %129 = vmatprep.subr.mxu0 0.0
    %130 = vmatpush1.msra.mxu0 0.0
    %131 = vmatprep.subr.mxu0 0.0
    %132 = vmatpush1.msra.mxu0 0.0
    %133 = vmatprep.subr.mxu0 0.0
    %134 = vmatpush1.msra.mxu0 0.0
    %135 = vmatprep.subr.mxu0 0.0
    %136 = vmatpush1.msra.mxu0 0.0
    %137 = vmatprep.subr.mxu0 0.0
    %138 = vmatpush1.msra.mxu0 0.0
    %139 = vmatprep.subr.mxu0 0.0
    %140 = vmatpush1.msra.mxu0 0.0
    %141 = vmatprep.subr.mxu0 0.0
    %142 = vmatpush1.msra.mxu0 0.0
    %143 = vmatprep.subr.mxu0 0.0
    %144 = vmatpush1.msra.mxu0 0.0
    %145 = vmatprep.subr.mxu0 0.0
    %146 = vmatpush1.msra.mxu0 0.0
    %147 = vmatprep.subr.mxu0 0.0
    %148 = vmatpush1.msra.mxu0 0.0
    %149 = vmatprep.subr.mxu0 0.0
    %150 = vmatpush1.msra.mxu0 0.0
    %151 = vmatprep.subr.mxu0 0.0
    %152 = vmatpush1.msra.mxu0 0.0
    %153 = vmatprep.subr.mxu0 0.0
    %154 = vmatpush1.msra.mxu0 0.0
    %155 = vmatprep.subr.mxu0 0.0
    %156 = vmatpush1.msra.mxu0 0.0
    %157 = vmatprep.subr.mxu0 0.0
    %158 = vmatpush1.msra.mxu0 0.0
    %159 = vmatprep.subr.mxu0 0.0
    %160 = vmatpush1.msra.mxu0 0.0
    %161 = vmatprep.subr.mxu0 0.0
    %162 = vmatpush1.msra.mxu0 0.0
    %163 = vmatprep.subr.mxu0 0.0
    %164 = vmatpush1.msra.mxu0 0.0
    %165 = vmatprep.subr.mxu0 0.0
    %166 = vmatpush1.msra.mxu0 0.0
    %167 = vmatprep.subr.mxu0 0.0
    %168 = vmatpush1.msra.mxu0 0.0
    %169 = vmatprep.subr.mxu0 0.0
    %170 = vmatpush1.msra.mxu0 0.0
    %171 = vmatprep.subr.mxu0 0.0
    %172 = vmatpush1.msra.mxu0 0.0
    %173 = vmatprep.subr.mxu0 0.0
    %174 = vmatpush1.msra.mxu0 0.0
    %175 = vmatprep.subr.mxu0 0.0
    %176 = vmatpush1.msra.mxu0 0.0
    %177 = vmatprep.subr.mxu0 0.0
    %178 = vmatpush1.msra.mxu0 0.0
    %179 = vmatprep.subr.mxu0 0.0
    %180 = vmatpush1.msra.mxu0 0.0
    %181 = vmatprep.subr.mxu0 0.0
    %182 = vmatpush1.msra.mxu0 0.0
    %183 = vmatprep.subr.mxu0 0.0
    %184 = vmatpush1.msra.mxu0 0.0
    %185 = vmatprep.mubr.f32.mxu0 0.0
    %186 = vmatmul.mubr.f32.gmra.mrb[0].mxu0 %v98
    %v187 = vpop.f32.mrb[0].mxu0
    %v188 = vadd.f32 %v79, %v187
    %v189 = vpop.f32.mrb[0].mxu0
    %v190 = vadd.f32 %v83, %v189
    %191 = vmatprep.mubr.f32.mxu0 0.0
    %192 = vmatmul.mubr.f32.gmra.mrb[0].mxu0 %v101
    %v193 = vpop.f32.mrb[0].mxu0
    %v194 = vadd.f32 %v79, %v193
    %v195 = vpop.f32.mrb[0].mxu0
    %v196 = vadd.f32 %v83, %v195
    %197 = vmatprep.mubr.f32.mxu0 0.0
    %198 = vmatmul.mubr.f32.gmra.mrb[0].mxu0 %v104
    %v199 = vpop.f32.mrb[0].mxu0
    %v200 = vadd.f32 %v79, %v199
    %v201 = vpop.f32.mrb[0].mxu0
    %v202 = vadd.f32 %v83, %v201
    %203 = vmatprep.mubr.f32.mxu0 0.0
    %204 = vmatmul.mubr.f32.gmra.mrb[0].mxu0 %v107
    %v205 = vpop.f32.mrb[0].mxu0
    %v206 = vadd.f32 %v79, %v205
    %v207 = vpop.f32.mrb[0].mxu0
    %v208 = vadd.f32 %v83, %v207
    %209 = vmatprep.mubr.f32.mxu0 0.0
    %210 = vmatmul.mubr.f32.gmra.mrb[0].mxu0 %v110
    %v211 = vpop.f32.mrb[0].mxu0
    %v212 = vadd.f32 %v79, %v211
    %v213 = vpop.f32.mrb[0].mxu0
    %v214 = vadd.f32 %v83, %v213
    %215 = vmatprep.mubr.f32.mxu0 0.0
    %216 = vmatmul.mubr.f32.gmra.mrb[0].mxu0 %v113
    %v217 = vpop.f32.mrb[0].mxu0
    %v218 = vadd.f32 %v79, %v217
    %v219 = vpop.f32.mrb[0].mxu0
    %v220 = vadd.f32 %v83, %v219
    %221 = vmatprep.mubr.f32.mxu0 0.0
    %222 = vmatmul.mubr.f32.gmra.mrb[0].mxu0 %v116
    %v223 = vpop.f32.mrb[0].mxu0
    %v224 = vadd.f32 %v79, %v223
    %v225 = vpop.f32.mrb[0].mxu0
    %v226 = vadd.f32 %v83, %v225
    %227 = vmatprep.mubr.f32.mxu0 0.0
    %228 = vmatmul.mubr.f32.gmra.mrb[0].mxu0 %v119
    %v229 = vpop.f32.mrb[0].mxu0
    %v230 = vadd.f32 %v79, %v229
    %v231 = vpop.f32.mrb[0].mxu0
    %v232 = vadd.f32 %v83, %v231
    %233 = vdwg.mxu0
    %234 = vmatprep.subr.mxu0 %v69
    %235 = vmatpush1.msra.mxu0 %v68
    %236 = vmatprep.subr.mxu0 %v73
    %237 = vmatpush1.msra.mxu0 %v72
    %238 = vmatprep.subr.mxu0 0.0
    %239 = vmatpush1.msra.mxu0 0.0
    %240 = vmatprep.subr.mxu0 0.0
    %241 = vmatpush1.msra.mxu0 0.0
    %242 = vmatprep.subr.mxu0 0.0
    %243 = vmatpush1.msra.mxu0 0.0
    %244 = vmatprep.subr.mxu0 0.0
    %245 = vmatpush1.msra.mxu0 0.0
    %246 = vmatprep.subr.mxu0 0.0
    %247 = vmatpush1.msra.mxu0 0.0
    %248 = vmatprep.subr.mxu0 0.0
    %249 = vmatpush1.msra.mxu0 0.0
    %250 = vmatprep.subr.mxu0 0.0
    %251 = vmatpush1.msra.mxu0 0.0
    %252 = vmatprep.subr.mxu0 0.0
    %253 = vmatpush1.msra.mxu0 0.0
    %254 = vmatprep.subr.mxu0 0.0
    %255 = vmatpush1.msra.mxu0 0.0
    %256 = vmatprep.subr.mxu0 0.0
    %257 = vmatpush1.msra.mxu0 0.0
    %258 = vmatprep.subr.mxu0 0.0
    %259 = vmatpush1.msra.mxu0 0.0
    %260 = vmatprep.subr.mxu0 0.0
    %261 = vmatpush1.msra.mxu0 0.0
    %262 = vmatprep.subr.mxu0 0.0
    %263 = vmatpush1.msra.mxu0 0.0
    %264 = vmatprep.subr.mxu0 0.0
    %265 = vmatpush1.msra.mxu0 0.0
    %266 = vmatprep.subr.mxu0 0.0
    %267 = vmatpush1.msra.mxu0 0.0
    %268 = vmatprep.subr.mxu0 0.0
    %269 = vmatpush1.msra.mxu0 0.0
    %270 = vmatprep.subr.mxu0 0.0
    %271 = vmatpush1.msra.mxu0 0.0
    %272 = vmatprep.subr.mxu0 0.0
    %273 = vmatpush1.msra.mxu0 0.0
    %274 = vmatprep.subr.mxu0 0.0
    %275 = vmatpush1.msra.mxu0 0.0
    %276 = vmatprep.subr.mxu0 0.0
    %277 = vmatpush1.msra.mxu0 0.0
    %278 = vmatprep.subr.mxu0 0.0
    %279 = vmatpush1.msra.mxu0 0.0
    %280 = vmatprep.subr.mxu0 0.0
    %281 = vmatpush1.msra.mxu0 0.0
    %282 = vmatprep.subr.mxu0 0.0
    %283 = vmatpush1.msra.mxu0 0.0
    %284 = vmatprep.subr.mxu0 0.0
    %285 = vmatpush1.msra.mxu0 0.0
    %286 = vmatprep.subr.mxu0 0.0
    %287 = vmatpush1.msra.mxu0 0.0
    %288 = vmatprep.subr.mxu0 0.0
    %289 = vmatpush1.msra.mxu0 0.0
    %290 = vmatprep.subr.mxu0 0.0
    %291 = vmatpush1.msra.mxu0 0.0
    %292 = vmatprep.subr.mxu0 0.0
    %293 = vmatpush1.msra.mxu0 0.0
    %294 = vmatprep.subr.mxu0 0.0
    %295 = vmatpush1.msra.mxu0 0.0
    %296 = vmatprep.subr.mxu0 0.0
    %297 = vmatpush1.msra.mxu0 0.0
    %298 = vmatprep.mubr.f32.mxu0 0.0
    %299 = vmatmul.mubr.f32.gmra.mrb[0].mxu0 %v98
    %v300 = vpop.f32.mrb[0].mxu0
    %v301 = vadd.f32 %v87, %v300
    %v302 = vpop.f32.mrb[0].mxu0
    %v303 = vadd.f32 %v91, %v302
    %304 = vmatprep.mubr.f32.mxu0 0.0
    %305 = vmatmul.mubr.f32.gmra.mrb[0].mxu0 %v101
    %v306 = vpop.f32.mrb[0].mxu0
    %v307 = vadd.f32 %v87, %v306
    %v308 = vpop.f32.mrb[0].mxu0
    %v309 = vadd.f32 %v91, %v308
    %310 = vmatprep.mubr.f32.mxu0 0.0
    %311 = vmatmul.mubr.f32.gmra.mrb[0].mxu0 %v104
    %v312 = vpop.f32.mrb[0].mxu0
    %v313 = vadd.f32 %v87, %v312
    %v314 = vpop.f32.mrb[0].mxu0
    %v315 = vadd.f32 %v91, %v314
    %316 = vmatprep.mubr.f32.mxu0 0.0
    %317 = vmatmul.mubr.f32.gmra.mrb[0].mxu0 %v107
    %v318 = vpop.f32.mrb[0].mxu0
    %v319 = vadd.f32 %v87, %v318
    %v320 = vpop.f32.mrb[0].mxu0
    %v321 = vadd.f32 %v91, %v320
    %322 = vmatprep.mubr.f32.mxu0 0.0
    %323 = vmatmul.mubr.f32.gmra.mrb[0].mxu0 %v110
    %v324 = vpop.f32.mrb[0].mxu0
    %v325 = vadd.f32 %v87, %v324
    %v326 = vpop.f32.mrb[0].mxu0
    %v327 = vadd.f32 %v91, %v326
    %328 = vmatprep.mubr.f32.mxu0 0.0
    %329 = vmatmul.mubr.f32.gmra.mrb[0].mxu0 %v113
    %v330 = vpop.f32.mrb[0].mxu0
    %v331 = vadd.f32 %v87, %v330
    %v332 = vpop.f32.mrb[0].mxu0
    %v333 = vadd.f32 %v91, %v332
    %334 = vmatprep.mubr.f32.mxu0 0.0
    %335 = vmatmul.mubr.f32.gmra.mrb[0].mxu0 %v116
    %v336 = vpop.f32.mrb[0].mxu0
    %v337 = vadd.f32 %v87, %v336
    %v338 = vpop.f32.mrb[0].mxu0
    %v339 = vadd.f32 %v91, %v338
    %340 = vmatprep.mubr.f32.mxu0 0.0
    %341 = vmatmul.mubr.f32.gmra.mrb[0].mxu0 %v119
    %v342 = vpop.f32.mrb[0].mxu0
    %v343 = vadd.f32 %v87, %v342
    %v344 = vpop.f32.mrb[0].mxu0
    %v345 = vadd.f32 %v91, %v344
    %346 = vdwg.mxu0
    %347 = vst [vmem:[#allocation2] sm:$0xff] %v188
    %348 = vst [vmem:[#allocation2 + $0x8] sm:$0xff] %v190
    %349 = vst [vmem:[#allocation2 + $0x10] sm:$0xff] %v301
    %350 = vst [vmem:[#allocation2 + $0x18] sm:$0xff] %v303
    %351 = vst [vmem:[#allocation2 + $0x20] sm:$0xff] %v194
    %352 = vst [vmem:[#allocation2 + $0x28] sm:$0xff] %v196
    %353 = vst [vmem:[#allocation2 + $0x30] sm:$0xff] %v307
    %354 = vst [vmem:[#allocation2 + $0x38] sm:$0xff] %v309
    %355 = vst [vmem:[#allocation2 + $0x40] sm:$0xff] %v200
    %356 = vst [vmem:[#allocation2 + $0x48] sm:$0xff] %v202
    %357 = vst [vmem:[#allocation2 + $0x50] sm:$0xff] %v313
    %358 = vst [vmem:[#allocation2 + $0x58] sm:$0xff] %v315
    %359 = vst [vmem:[#allocation2 + $0x60] sm:$0xff] %v206
    %360 = vst [vmem:[#allocation2 + $0x68] sm:$0xff] %v208
    %361 = vst [vmem:[#allocation2 + $0x70] sm:$0xff] %v319
    %362 = vst [vmem:[#allocation2 + $0x78] sm:$0xff] %v321
    %363 = vst [vmem:[#allocation2 + $0x80] sm:$0xff] %v212
    %364 = vst [vmem:[#allocation2 + $0x88] sm:$0xff] %v214
    %365 = vst [vmem:[#allocation2 + $0x90] sm:$0xff] %v325
    %366 = vst [vmem:[#allocation2 + $0x98] sm:$0xff] %v327
    %367 = vst [vmem:[#allocation2 + $0xa0] sm:$0xff] %v218
    %368 = vst [vmem:[#allocation2 + $0xa8] sm:$0xff] %v220
    %369 = vst [vmem:[#allocation2 + $0xb0] sm:$0xff] %v331
    %370 = vst [vmem:[#allocation2 + $0xb8] sm:$0xff] %v333
    %371 = vst [vmem:[#allocation2 + $0xc0] sm:$0xff] %v224
    %372 = vst [vmem:[#allocation2 + $0xc8] sm:$0xff] %v226
    %373 = vst [vmem:[#allocation2 + $0xd0] sm:$0xff] %v337
    %374 = vst [vmem:[#allocation2 + $0xd8] sm:$0xff] %v339
    %375 = vst [vmem:[#allocation2 + $0xe0] sm:$0xff] %v230
    %376 = vst [vmem:[#allocation2 + $0xe8] sm:$0xff] %v232
    %377 = vst [vmem:[#allocation2 + $0xf0] sm:$0xff] %v343
    %378 = vst [vmem:[#allocation2 + $0xf8] sm:$0xff] %v345
    %s379 = smul.u32 4, 16
    %s380 = smul.u32 %s379, 4
    %s381 = sshll.u32 %s380, 4
    %382 = dma.done [#allocation4], %s381
    %s383 = smul.u32 0, 4
    %s384 = smul.addr %s383, 8
    %s385 = scalar_lea.vmem [#allocation2], %s384
    %v386 = vld [vmem:[%s385] sm:$0xff]
    %v387 = vld [vmem:[%s385 + $0x8] sm:$0xff]
    %v388 = vld [vmem:[%s385 + $0x10] sm:$0xff]
    %v389 = vld [vmem:[%s385 + $0x18] sm:$0xff]
    %v390 = vld [vmem:[#allocation3] sm:$0xff]
    %v391 = vld [vmem:[#allocation3 + $0x8] sm:$0xff]
    %v392 = vld [vmem:[#allocation3 + $0x10] sm:$0xff]
    %v393 = vld [vmem:[#allocation3 + $0x18] sm:$0xff]
    %v394 = vld [vmem:[#allocation3 + $0x20] sm:$0xff]
    %v395 = vld [vmem:[#allocation3 + $0x28] sm:$0xff]
    %v396 = vld [vmem:[#allocation3 + $0x30] sm:$0xff]
    %v397 = vld [vmem:[#allocation3 + $0x38] sm:$0xff]
    %v398 = vld [vmem:[#allocation3 + $0x40] sm:$0xff]
    %v399 = vld [vmem:[#allocation3 + $0x48] sm:$0xff]
    %v400 = vld [vmem:[#allocation3 + $0x50] sm:$0xff]
    %v401 = vld [vmem:[#allocation3 + $0x58] sm:$0xff]
    %v402 = vld [vmem:[#allocation3 + $0x60] sm:$0xff]
    %v403 = vld [vmem:[#allocation3 + $0x68] sm:$0xff]
    %v404 = vld [vmem:[#allocation3 + $0x70] sm:$0xff]
    %v405 = vld [vmem:[#allocation3 + $0x78] sm:$0xff]
    %v406 = vld [vmem:[#allocation3 + $0x80] sm:$0xff]
    %v407 = vld [vmem:[#allocation3 + $0x88] sm:$0xff]
    %v408 = vld [vmem:[#allocation3 + $0x90] sm:$0xff]
    %v409 = vld [vmem:[#allocation3 + $0x98] sm:$0xff]
    %v410 = vld [vmem:[#allocation3 + $0xa0] sm:$0xff]
    %v411 = vld [vmem:[#allocation3 + $0xa8] sm:$0xff]
    %v412 = vld [vmem:[#allocation3 + $0xb0] sm:$0xff]
    %v413 = vld [vmem:[#allocation3 + $0xb8] sm:$0xff]
    %v414 = vld [vmem:[#allocation3 + $0xc0] sm:$0xff]
    %v415 = vld [vmem:[#allocation3 + $0xc8] sm:$0xff]
    %v416 = vld [vmem:[#allocation3 + $0xd0] sm:$0xff]
    %v417 = vld [vmem:[#allocation3 + $0xd8] sm:$0xff]
    %v418 = vld [vmem:[#allocation3 + $0xe0] sm:$0xff]
    %v419 = vld [vmem:[#allocation3 + $0xe8] sm:$0xff]
    %v420 = vld [vmem:[#allocation3 + $0xf0] sm:$0xff]
    %v421 = vld [vmem:[#allocation3 + $0xf8] sm:$0xff]
    %422 = vmatprep.subr.bf16.mxu0 %v391
    %423 = vmatpush1.bf16.msra.mxu0 %v390
    %424 = vmatprep.subr.bf16.mxu0 %v395
    %425 = vmatpush1.bf16.msra.mxu0 %v394
    %426 = vmatprep.subr.bf16.mxu0 %v399
    %427 = vmatpush1.bf16.msra.mxu0 %v398
    %428 = vmatprep.subr.bf16.mxu0 %v403
    %429 = vmatpush1.bf16.msra.mxu0 %v402
    %430 = vmatprep.subr.bf16.mxu0 %v407
    %431 = vmatpush1.bf16.msra.mxu0 %v406
    %432 = vmatprep.subr.bf16.mxu0 %v411
    %433 = vmatpush1.bf16.msra.mxu0 %v410
    %434 = vmatprep.subr.bf16.mxu0 %v415
    %435 = vmatpush1.bf16.msra.mxu0 %v414
    %436 = vmatprep.subr.bf16.mxu0 %v419
    %437 = vmatpush1.bf16.msra.mxu0 %v418
    %438 = vmatprep.subr.bf16.mxu0 0
    %439 = vmatpush1.bf16.msra.mxu0 0
    %440 = vmatprep.subr.bf16.mxu0 0
    %441 = vmatpush1.bf16.msra.mxu0 0
    %442 = vmatprep.subr.bf16.mxu0 0
    %443 = vmatpush1.bf16.msra.mxu0 0
    %444 = vmatprep.subr.bf16.mxu0 0
    %445 = vmatpush1.bf16.msra.mxu0 0
    %446 = vmatprep.subr.bf16.mxu0 0
    %447 = vmatpush1.bf16.msra.mxu0 0
    %448 = vmatprep.subr.bf16.mxu0 0
    %449 = vmatpush1.bf16.msra.mxu0 0
    %450 = vmatprep.subr.bf16.mxu0 0
    %451 = vmatpush1.bf16.msra.mxu0 0
    %452 = vmatprep.subr.bf16.mxu0 0
    %453 = vmatpush1.bf16.msra.mxu0 0
    %454 = vmatprep.mubr.bf16.mxu0 0
    %455 = vmatmul.mubr.bf16.gmra.mrb[0].mxu0 0
    %v456 = vpop.f32.mrb[0].mxu0
    %v457 = vadd.f32 0.0, %v456
    %v458 = vpop.f32.mrb[0].mxu0
    %v459 = vadd.f32 0.0, %v458
    %v460 = vpop.f32.mrb[0].mxu0
    %v461 = vpop.f32.mrb[0].mxu0
    %462 = vdwg.mxu0
    %463 = vmatprep.subr.bf16.mxu0 %v393
    %464 = vmatpush1.bf16.msra.mxu0 %v392
    %465 = vmatprep.subr.bf16.mxu0 %v397
    %466 = vmatpush1.bf16.msra.mxu0 %v396
    %467 = vmatprep.subr.bf16.mxu0 %v401
    %468 = vmatpush1.bf16.msra.mxu0 %v400
    %469 = vmatprep.subr.bf16.mxu0 %v405
    %470 = vmatpush1.bf16.msra.mxu0 %v404
    %471 = vmatprep.subr.bf16.mxu0 %v409
    %472 = vmatpush1.bf16.msra.mxu0 %v408
    %473 = vmatprep.subr.bf16.mxu0 %v413
    %474 = vmatpush1.bf16.msra.mxu0 %v412
    %475 = vmatprep.subr.bf16.mxu0 %v417
    %476 = vmatpush1.bf16.msra.mxu0 %v416
    %477 = vmatprep.subr.bf16.mxu0 %v421
    %478 = vmatpush1.bf16.msra.mxu0 %v420
    %479 = vmatprep.subr.bf16.mxu0 0
    %480 = vmatpush1.bf16.msra.mxu0 0
    %481 = vmatprep.subr.bf16.mxu0 0
    %482 = vmatpush1.bf16.msra.mxu0 0
    %483 = vmatprep.subr.bf16.mxu0 0
    %484 = vmatpush1.bf16.msra.mxu0 0
    %485 = vmatprep.subr.bf16.mxu0 0
    %486 = vmatpush1.bf16.msra.mxu0 0
    %487 = vmatprep.subr.bf16.mxu0 0
    %488 = vmatpush1.bf16.msra.mxu0 0
    %489 = vmatprep.subr.bf16.mxu0 0
    %490 = vmatpush1.bf16.msra.mxu0 0
    %491 = vmatprep.subr.bf16.mxu0 0
    %492 = vmatpush1.bf16.msra.mxu0 0
    %493 = vmatprep.subr.bf16.mxu0 0
    %494 = vmatpush1.bf16.msra.mxu0 0
    %495 = vmatprep.mubr.bf16.mxu0 0
    %496 = vmatmul.mubr.bf16.gmra.mrb[0].mxu0 0
    %v497 = vpop.f32.mrb[0].mxu0
    %v498 = vadd.f32 0.0, %v497
    %v499 = vpop.f32.mrb[0].mxu0
    %v500 = vadd.f32 0.0, %v499
    %v501 = vpop.f32.mrb[0].mxu0
    %v502 = vpop.f32.mrb[0].mxu0
    %503 = vdwg.mxu0
    %v504 = vadd.f32 %v386, %v457
    %v505 = vadd.f32 %v387, %v459
    %v506 = vadd.f32 %v388, %v498
    %v507 = vadd.f32 %v389, %v500
    %v508 = vtanh.pop %v504
    %v509 = vtanh.pop %v505
    %v510 = vtanh.pop %v506
    %v511 = vtanh.pop %v507
    %v512 = vmul.f32 %v508, 0.5
    %v513 = vadd.f32 %v512, 0.5
    %v514 = vmul.f32 %v509, 0.5
    %v515 = vadd.f32 %v514, 0.5
    %v516 = vmul.f32 %v511, 0.5
    %v517 = vadd.f32 %v516, 0.5
    %v518 = vmul.f32 %v515, 0.0
    %v519 = vmul.f32 %v513, %v510
    %v520 = vadd.f32 %v518, %v519
    %v521 = vtanh.pop %v520
    %v522 = vmul.f32 %v517, %v521
    %s523 = smul.u32 1, 4
    %s524 = smul.addr %s523, 8
    %s525 = scalar_lea.vmem [#allocation2], %s524
    %v526 = vld [vmem:[%s525] sm:$0xff]
    %v527 = vld [vmem:[%s525 + $0x8] sm:$0xff]
    %v528 = vld [vmem:[%s525 + $0x10] sm:$0xff]
    %v529 = vld [vmem:[%s525 + $0x18] sm:$0xff]
    %v530 = vpack.c.bf16 %v522, %v522
    %531 = vmatprep.subr.bf16.mxu0 %v391
    %532 = vmatpush1.bf16.msra.mxu0 %v390
    %533 = vmatprep.subr.bf16.mxu0 %v395
    %534 = vmatpush1.bf16.msra.mxu0 %v394
    %535 = vmatprep.subr.bf16.mxu0 %v399
    %536 = vmatpush1.bf16.msra.mxu0 %v398
    %537 = vmatprep.subr.bf16.mxu0 %v403
    %538 = vmatpush1.bf16.msra.mxu0 %v402
    %539 = vmatprep.subr.bf16.mxu0 %v407
    %540 = vmatpush1.bf16.msra.mxu0 %v406
    %541 = vmatprep.subr.bf16.mxu0 %v411
    %542 = vmatpush1.bf16.msra.mxu0 %v410
    %543 = vmatprep.subr.bf16.mxu0 %v415
    %544 = vmatpush1.bf16.msra.mxu0 %v414
    %545 = vmatprep.subr.bf16.mxu0 %v419
    %546 = vmatpush1.bf16.msra.mxu0 %v418
    %547 = vmatprep.subr.bf16.mxu0 0
    %548 = vmatpush1.bf16.msra.mxu0 0
    %549 = vmatprep.subr.bf16.mxu0 0
    %550 = vmatpush1.bf16.msra.mxu0 0
    %551 = vmatprep.subr.bf16.mxu0 0
    %552 = vmatpush1.bf16.msra.mxu0 0
    %553 = vmatprep.subr.bf16.mxu0 0
    %554 = vmatpush1.bf16.msra.mxu0 0
    %555 = vmatprep.subr.bf16.mxu0 0
    %556 = vmatpush1.bf16.msra.mxu0 0
    %557 = vmatprep.subr.bf16.mxu0 0
    %558 = vmatpush1.bf16.msra.mxu0 0
    %559 = vmatprep.subr.bf16.mxu0 0
    %560 = vmatpush1.bf16.msra.mxu0 0
    %561 = vmatprep.subr.bf16.mxu0 0
    %562 = vmatpush1.bf16.msra.mxu0 0
    %563 = vmatprep.mubr.bf16.mxu0 0
    %564 = vmatmul.mubr.bf16.gmra.mrb[0].mxu0 %v530
    %v565 = vpop.f32.mrb[0].mxu0
    %v566 = vadd.f32 0.0, %v565
    %v567 = vpop.f32.mrb[0].mxu0
    %v568 = vadd.f32 0.0, %v567
    %v569 = vpop.f32.mrb[0].mxu0
    %v570 = vpop.f32.mrb[0].mxu0
    %571 = vdwg.mxu0
    %572 = vmatprep.subr.bf16.mxu0 %v393
    %573 = vmatpush1.bf16.msra.mxu0 %v392
    %574 = vmatprep.subr.bf16.mxu0 %v397
    %575 = vmatpush1.bf16.msra.mxu0 %v396
    %576 = vmatprep.subr.bf16.mxu0 %v401
    %577 = vmatpush1.bf16.msra.mxu0 %v400
    %578 = vmatprep.subr.bf16.mxu0 %v405
    %579 = vmatpush1.bf16.msra.mxu0 %v404
    %580 = vmatprep.subr.bf16.mxu0 %v409
    %581 = vmatpush1.bf16.msra.mxu0 %v408
    %582 = vmatprep.subr.bf16.mxu0 %v413
    %583 = vmatpush1.bf16.msra.mxu0 %v412
    %584 = vmatprep.subr.bf16.mxu0 %v417
    %585 = vmatpush1.bf16.msra.mxu0 %v416
    %586 = vmatprep.subr.bf16.mxu0 %v421
    %587 = vmatpush1.bf16.msra.mxu0 %v420
    %588 = vmatprep.subr.bf16.mxu0 0
    %589 = vmatpush1.bf16.msra.mxu0 0
    %590 = vmatprep.subr.bf16.mxu0 0
    %591 = vmatpush1.bf16.msra.mxu0 0
    %592 = vmatprep.subr.bf16.mxu0 0
    %593 = vmatpush1.bf16.msra.mxu0 0
    %594 = vmatprep.subr.bf16.mxu0 0
    %595 = vmatpush1.bf16.msra.mxu0 0
    %596 = vmatprep.subr.bf16.mxu0 0
    %597 = vmatpush1.bf16.msra.mxu0 0
    %598 = vmatprep.subr.bf16.mxu0 0
    %599 = vmatpush1.bf16.msra.mxu0 0
    %600 = vmatprep.subr.bf16.mxu0 0
    %601 = vmatpush1.bf16.msra.mxu0 0
    %602 = vmatprep.subr.bf16.mxu0 0
    %603 = vmatpush1.bf16.msra.mxu0 0
    %604 = vmatprep.mubr.bf16.mxu0 0
    %605 = vmatmul.mubr.bf16.gmra.mrb[0].mxu0 %v530
    %v606 = vpop.f32.mrb[0].mxu0
    %v607 = vadd.f32 0.0, %v606
    %v608 = vpop.f32.mrb[0].mxu0
    %v609 = vadd.f32 0.0, %v608
    %v610 = vpop.f32.mrb[0].mxu0
    %v611 = vpop.f32.mrb[0].mxu0
    %612 = vdwg.mxu0
    %v613 = vadd.f32 %v526, %v566
    %v614 = vadd.f32 %v527, %v568
    %v615 = vadd.f32 %v528, %v607
    %v616 = vadd.f32 %v529, %v609
    %v617 = vtanh.pop %v613
    %v618 = vtanh.pop %v614
    %v619 = vtanh.pop %v615
    %v620 = vtanh.pop %v616
    %v621 = vmul.f32 %v617, 0.5
    %v622 = vadd.f32 %v621, 0.5
    %v623 = vmul.f32 %v618, 0.5
    %v624 = vadd.f32 %v623, 0.5
    %v625 = vmul.f32 %v620, 0.5
    %v626 = vadd.f32 %v625, 0.5
    %v627 = vmul.f32 %v624, %v520
    %v628 = vmul.f32 %v622, %v619
    %v629 = vadd.f32 %v627, %v628
    %v630 = vtanh.pop %v629
    %v631 = vmul.f32 %v626, %v630
    %s632 = smul.u32 2, 4
    %s633 = smul.addr %s632, 8
    %s634 = scalar_lea.vmem [#allocation2], %s633
    %v635 = vld [vmem:[%s634] sm:$0xff]
    %v636 = vld [vmem:[%s634 + $0x8] sm:$0xff]
    %v637 = vld [vmem:[%s634 + $0x10] sm:$0xff]
    %v638 = vld [vmem:[%s634 + $0x18] sm:$0xff]
    %v639 = vpack.c.bf16 %v631, %v631
    %640 = vmatprep.subr.bf16.mxu0 %v391
    %641 = vmatpush1.bf16.msra.mxu0 %v390
    %642 = vmatprep.subr.bf16.mxu0 %v395
    %643 = vmatpush1.bf16.msra.mxu0 %v394
    %644 = vmatprep.subr.bf16.mxu0 %v399
    %645 = vmatpush1.bf16.msra.mxu0 %v398
    %646 = vmatprep.subr.bf16.mxu0 %v403
    %647 = vmatpush1.bf16.msra.mxu0 %v402
    %648 = vmatprep.subr.bf16.mxu0 %v407
    %649 = vmatpush1.bf16.msra.mxu0 %v406
    %650 = vmatprep.subr.bf16.mxu0 %v411
    %651 = vmatpush1.bf16.msra.mxu0 %v410
    %652 = vmatprep.subr.bf16.mxu0 %v415
    %653 = vmatpush1.bf16.msra.mxu0 %v414
    %654 = vmatprep.subr.bf16.mxu0 %v419
    %655 = vmatpush1.bf16.msra.mxu0 %v418
    %656 = vmatprep.subr.bf16.mxu0 0
    %657 = vmatpush1.bf16.msra.mxu0 0
    %658 = vmatprep.subr.bf16.mxu0 0
    %659 = vmatpush1.bf16.msra.mxu0 0
    %660 = vmatprep.subr.bf16.mxu0 0
    %661 = vmatpush1.bf16.msra.mxu0 0
    %662 = vmatprep.subr.bf16.mxu0 0
    %663 = vmatpush1.bf16.msra.mxu0 0
    %664 = vmatprep.subr.bf16.mxu0 0
    %665 = vmatpush1.bf16.msra.mxu0 0
    %666 = vmatprep.subr.bf16.mxu0 0
    %667 = vmatpush1.bf16.msra.mxu0 0
    %668 = vmatprep.subr.bf16.mxu0 0
    %669 = vmatpush1.bf16.msra.mxu0 0
    %670 = vmatprep.subr.bf16.mxu0 0
    %671 = vmatpush1.bf16.msra.mxu0 0
    %672 = vmatprep.mubr.bf16.mxu0 0
    %673 = vmatmul.mubr.bf16.gmra.mrb[0].mxu0 %v639
    %v674 = vpop.f32.mrb[0].mxu0
    %v675 = vadd.f32 0.0, %v674
    %v676 = vpop.f32.mrb[0].mxu0
    %v677 = vadd.f32 0.0, %v676
    %v678 = vpop.f32.mrb[0].mxu0
    %v679 = vpop.f32.mrb[0].mxu0
    %680 = vdwg.mxu0
    %681 = vmatprep.subr.bf16.mxu0 %v393
    %682 = vmatpush1.bf16.msra.mxu0 %v392
    %683 = vmatprep.subr.bf16.mxu0 %v397
    %684 = vmatpush1.bf16.msra.mxu0 %v396
    %685 = vmatprep.subr.bf16.mxu0 %v401
    %686 = vmatpush1.bf16.msra.mxu0 %v400
    %687 = vmatprep.subr.bf16.mxu0 %v405
    %688 = vmatpush1.bf16.msra.mxu0 %v404
    %689 = vmatprep.subr.bf16.mxu0 %v409
    %690 = vmatpush1.bf16.msra.mxu0 %v408
    %691 = vmatprep.subr.bf16.mxu0 %v413
    %692 = vmatpush1.bf16.msra.mxu0 %v412
    %693 = vmatprep.subr.bf16.mxu0 %v417
    %694 = vmatpush1.bf16.msra.mxu0 %v416
    %695 = vmatprep.subr.bf16.mxu0 %v421
    %696 = vmatpush1.bf16.msra.mxu0 %v420
    %697 = vmatprep.subr.bf16.mxu0 0
    %698 = vmatpush1.bf16.msra.mxu0 0
    %699 = vmatprep.subr.bf16.mxu0 0
    %700 = vmatpush1.bf16.msra.mxu0 0
    %701 = vmatprep.subr.bf16.mxu0 0
    %702 = vmatpush1.bf16.msra.mxu0 0
    %703 = vmatprep.subr.bf16.mxu0 0
    %704 = vmatpush1.bf16.msra.mxu0 0
    %705 = vmatprep.subr.bf16.mxu0 0
    %706 = vmatpush1.bf16.msra.mxu0 0
    %707 = vmatprep.subr.bf16.mxu0 0
    %708 = vmatpush1.bf16.msra.mxu0 0
    %709 = vmatprep.subr.bf16.mxu0 0
    %710 = vmatpush1.bf16.msra.mxu0 0
    %711 = vmatprep.subr.bf16.mxu0 0
    %712 = vmatpush1.bf16.msra.mxu0 0
    %713 = vmatprep.mubr.bf16.mxu0 0
    %714 = vmatmul.mubr.bf16.gmra.mrb[0].mxu0 %v639
    %v715 = vpop.f32.mrb[0].mxu0
    %v716 = vadd.f32 0.0, %v715
    %v717 = vpop.f32.mrb[0].mxu0
    %v718 = vadd.f32 0.0, %v717
    %v719 = vpop.f32.mrb[0].mxu0
    %v720 = vpop.f32.mrb[0].mxu0
    %721 = vdwg.mxu0
    %v722 = vadd.f32 %v635, %v675
    %v723 = vadd.f32 %v636, %v677
    %v724 = vadd.f32 %v637, %v716
    %v725 = vadd.f32 %v638, %v718
    %v726 = vtanh.pop %v722
    %v727 = vtanh.pop %v723
    %v728 = vtanh.pop %v724
    %v729 = vtanh.pop %v725
    %v730 = vmul.f32 %v726, 0.5
    %v731 = vadd.f32 %v730, 0.5
    %v732 = vmul.f32 %v727, 0.5
    %v733 = vadd.f32 %v732, 0.5
    %v734 = vmul.f32 %v729, 0.5
    %v735 = vadd.f32 %v734, 0.5
    %v736 = vmul.f32 %v733, %v629
    %v737 = vmul.f32 %v731, %v728
    %v738 = vadd.f32 %v736, %v737
    %v739 = vtanh.pop %v738
    %v740 = vmul.f32 %v735, %v739
    %s741 = smul.u32 3, 4
    %s742 = smul.addr %s741, 8
    %s743 = scalar_lea.vmem [#allocation2], %s742
    %v744 = vld [vmem:[%s743] sm:$0xff]
    %v745 = vld [vmem:[%s743 + $0x8] sm:$0xff]
    %v746 = vld [vmem:[%s743 + $0x10] sm:$0xff]
    %v747 = vld [vmem:[%s743 + $0x18] sm:$0xff]
    %v748 = vpack.c.bf16 %v740, %v740
    %749 = vmatprep.subr.bf16.mxu0 %v391
    %750 = vmatpush1.bf16.msra.mxu0 %v390
    %751 = vmatprep.subr.bf16.mxu0 %v395
    %752 = vmatpush1.bf16.msra.mxu0 %v394
    %753 = vmatprep.subr.bf16.mxu0 %v399
    %754 = vmatpush1.bf16.msra.mxu0 %v398
    %755 = vmatprep.subr.bf16.mxu0 %v403
    %756 = vmatpush1.bf16.msra.mxu0 %v402
    %757 = vmatprep.subr.bf16.mxu0 %v407
    %758 = vmatpush1.bf16.msra.mxu0 %v406
    %759 = vmatprep.subr.bf16.mxu0 %v411
    %760 = vmatpush1.bf16.msra.mxu0 %v410
    %761 = vmatprep.subr.bf16.mxu0 %v415
    %762 = vmatpush1.bf16.msra.mxu0 %v414
    %763 = vmatprep.subr.bf16.mxu0 %v419
    %764 = vmatpush1.bf16.msra.mxu0 %v418
    %765 = vmatprep.subr.bf16.mxu0 0
    %766 = vmatpush1.bf16.msra.mxu0 0
    %767 = vmatprep.subr.bf16.mxu0 0
    %768 = vmatpush1.bf16.msra.mxu0 0
    %769 = vmatprep.subr.bf16.mxu0 0
    %770 = vmatpush1.bf16.msra.mxu0 0
    %771 = vmatprep.subr.bf16.mxu0 0
    %772 = vmatpush1.bf16.msra.mxu0 0
    %773 = vmatprep.subr.bf16.mxu0 0
    %774 = vmatpush1.bf16.msra.mxu0 0
    %775 = vmatprep.subr.bf16.mxu0 0
    %776 = vmatpush1.bf16.msra.mxu0 0
    %777 = vmatprep.subr.bf16.mxu0 0
    %778 = vmatpush1.bf16.msra.mxu0 0
    %779 = vmatprep.subr.bf16.mxu0 0
    %780 = vmatpush1.bf16.msra.mxu0 0
    %781 = vmatprep.mubr.bf16.mxu0 0
    %782 = vmatmul.mubr.bf16.gmra.mrb[0].mxu0 %v748
    %v783 = vpop.f32.mrb[0].mxu0
    %v784 = vadd.f32 0.0, %v783
    %v785 = vpop.f32.mrb[0].mxu0
    %v786 = vadd.f32 0.0, %v785
    %v787 = vpop.f32.mrb[0].mxu0
    %v788 = vpop.f32.mrb[0].mxu0
    %789 = vdwg.mxu0
    %790 = vmatprep.subr.bf16.mxu0 %v393
    %791 = vmatpush1.bf16.msra.mxu0 %v392
    %792 = vmatprep.subr.bf16.mxu0 %v397
    %793 = vmatpush1.bf16.msra.mxu0 %v396
    %794 = vmatprep.subr.bf16.mxu0 %v401
    %795 = vmatpush1.bf16.msra.mxu0 %v400
    %796 = vmatprep.subr.bf16.mxu0 %v405
    %797 = vmatpush1.bf16.msra.mxu0 %v404
    %798 = vmatprep.subr.bf16.mxu0 %v409
    %799 = vmatpush1.bf16.msra.mxu0 %v408
    %800 = vmatprep.subr.bf16.mxu0 %v413
    %801 = vmatpush1.bf16.msra.mxu0 %v412
    %802 = vmatprep.subr.bf16.mxu0 %v417
    %803 = vmatpush1.bf16.msra.mxu0 %v416
    %804 = vmatprep.subr.bf16.mxu0 %v421
    %805 = vmatpush1.bf16.msra.mxu0 %v420
    %806 = vmatprep.subr.bf16.mxu0 0
    %807 = vmatpush1.bf16.msra.mxu0 0
    %808 = vmatprep.subr.bf16.mxu0 0
    %809 = vmatpush1.bf16.msra.mxu0 0
    %810 = vmatprep.subr.bf16.mxu0 0
    %811 = vmatpush1.bf16.msra.mxu0 0
    %812 = vmatprep.subr.bf16.mxu0 0
    %813 = vmatpush1.bf16.msra.mxu0 0
    %814 = vmatprep.subr.bf16.mxu0 0
    %815 = vmatpush1.bf16.msra.mxu0 0
    %816 = vmatprep.subr.bf16.mxu0 0
    %817 = vmatpush1.bf16.msra.mxu0 0
    %818 = vmatprep.subr.bf16.mxu0 0
    %819 = vmatpush1.bf16.msra.mxu0 0
    %820 = vmatprep.subr.bf16.mxu0 0
    %821 = vmatpush1.bf16.msra.mxu0 0
    %822 = vmatprep.mubr.bf16.mxu0 0
    %823 = vmatmul.mubr.bf16.gmra.mrb[0].mxu0 %v748
    %v824 = vpop.f32.mrb[0].mxu0
    %v825 = vadd.f32 0.0, %v824
    %v826 = vpop.f32.mrb[0].mxu0
    %v827 = vadd.f32 0.0, %v826
    %v828 = vpop.f32.mrb[0].mxu0
    %v829 = vpop.f32.mrb[0].mxu0
    %830 = vdwg.mxu0
    %v831 = vadd.f32 %v744, %v784
    %v832 = vadd.f32 %v745, %v786
    %v833 = vadd.f32 %v746, %v825
    %v834 = vadd.f32 %v747, %v827
    %v835 = vtanh.pop %v831
    %v836 = vtanh.pop %v832
    %v837 = vtanh.pop %v833
    %v838 = vtanh.pop %v834
    %v839 = vmul.f32 %v835, 0.5
    %v840 = vadd.f32 %v839, 0.5
    %v841 = vmul.f32 %v836, 0.5
    %v842 = vadd.f32 %v841, 0.5
    %v843 = vmul.f32 %v838, 0.5
    %v844 = vadd.f32 %v843, 0.5
    %v845 = vmul.f32 %v842, %v738
    %v846 = vmul.f32 %v840, %v837
    %v847 = vadd.f32 %v845, %v846
    %v848 = vtanh.pop %v847
    %v849 = vmul.f32 %v844, %v848
    %s850 = smul.u32 4, 4
    %s851 = smul.addr %s850, 8
    %s852 = scalar_lea.vmem [#allocation2], %s851
    %v853 = vld [vmem:[%s852] sm:$0xff]
    %v854 = vld [vmem:[%s852 + $0x8] sm:$0xff]
    %v855 = vld [vmem:[%s852 + $0x10] sm:$0xff]
    %v856 = vld [vmem:[%s852 + $0x18] sm:$0xff]
    %v857 = vpack.c.bf16 %v849, %v849
    %858 = vmatprep.subr.bf16.mxu0 %v391
    %859 = vmatpush1.bf16.msra.mxu0 %v390
    %860 = vmatprep.subr.bf16.mxu0 %v395
    %861 = vmatpush1.bf16.msra.mxu0 %v394
    %862 = vmatprep.subr.bf16.mxu0 %v399
    %863 = vmatpush1.bf16.msra.mxu0 %v398
    %864 = vmatprep.subr.bf16.mxu0 %v403
    %865 = vmatpush1.bf16.msra.mxu0 %v402
    %866 = vmatprep.subr.bf16.mxu0 %v407
    %867 = vmatpush1.bf16.msra.mxu0 %v406
    %868 = vmatprep.subr.bf16.mxu0 %v411
    %869 = vmatpush1.bf16.msra.mxu0 %v410
    %870 = vmatprep.subr.bf16.mxu0 %v415
    %871 = vmatpush1.bf16.msra.mxu0 %v414
    %872 = vmatprep.subr.bf16.mxu0 %v419
    %873 = vmatpush1.bf16.msra.mxu0 %v418
    %874 = vmatprep.subr.bf16.mxu0 0
    %875 = vmatpush1.bf16.msra.mxu0 0
    %876 = vmatprep.subr.bf16.mxu0 0
    %877 = vmatpush1.bf16.msra.mxu0 0
    %878 = vmatprep.subr.bf16.mxu0 0
    %879 = vmatpush1.bf16.msra.mxu0 0
    %880 = vmatprep.subr.bf16.mxu0 0
    %881 = vmatpush1.bf16.msra.mxu0 0
    %882 = vmatprep.subr.bf16.mxu0 0
    %883 = vmatpush1.bf16.msra.mxu0 0
    %884 = vmatprep.subr.bf16.mxu0 0
    %885 = vmatpush1.bf16.msra.mxu0 0
    %886 = vmatprep.subr.bf16.mxu0 0
    %887 = vmatpush1.bf16.msra.mxu0 0
    %888 = vmatprep.subr.bf16.mxu0 0
    %889 = vmatpush1.bf16.msra.mxu0 0
    %890 = vmatprep.mubr.bf16.mxu0 0
    %891 = vmatmul.mubr.bf16.gmra.mrb[0].mxu0 %v857
    %v892 = vpop.f32.mrb[0].mxu0
    %v893 = vadd.f32 0.0, %v892
    %v894 = vpop.f32.mrb[0].mxu0
    %v895 = vadd.f32 0.0, %v894
    %v896 = vpop.f32.mrb[0].mxu0
    %v897 = vpop.f32.mrb[0].mxu0
    %898 = vdwg.mxu0
    %899 = vmatprep.subr.bf16.mxu0 %v393
    %900 = vmatpush1.bf16.msra.mxu0 %v392
    %901 = vmatprep.subr.bf16.mxu0 %v397
    %902 = vmatpush1.bf16.msra.mxu0 %v396
    %903 = vmatprep.subr.bf16.mxu0 %v401
    %904 = vmatpush1.bf16.msra.mxu0 %v400
    %905 = vmatprep.subr.bf16.mxu0 %v405
    %906 = vmatpush1.bf16.msra.mxu0 %v404
    %907 = vmatprep.subr.bf16.mxu0 %v409
    %908 = vmatpush1.bf16.msra.mxu0 %v408
    %909 = vmatprep.subr.bf16.mxu0 %v413
    %910 = vmatpush1.bf16.msra.mxu0 %v412
    %911 = vmatprep.subr.bf16.mxu0 %v417
    %912 = vmatpush1.bf16.msra.mxu0 %v416
    %913 = vmatprep.subr.bf16.mxu0 %v421
    %914 = vmatpush1.bf16.msra.mxu0 %v420
    %915 = vmatprep.subr.bf16.mxu0 0
    %916 = vmatpush1.bf16.msra.mxu0 0
    %917 = vmatprep.subr.bf16.mxu0 0
    %918 = vmatpush1.bf16.msra.mxu0 0
    %919 = vmatprep.subr.bf16.mxu0 0
    %920 = vmatpush1.bf16.msra.mxu0 0
    %921 = vmatprep.subr.bf16.mxu0 0
    %922 = vmatpush1.bf16.msra.mxu0 0
    %923 = vmatprep.subr.bf16.mxu0 0
    %924 = vmatpush1.bf16.msra.mxu0 0
    %925 = vmatprep.subr.bf16.mxu0 0
    %926 = vmatpush1.bf16.msra.mxu0 0
    %927 = vmatprep.subr.bf16.mxu0 0
    %928 = vmatpush1.bf16.msra.mxu0 0
    %929 = vmatprep.subr.bf16.mxu0 0
    %930 = vmatpush1.bf16.msra.mxu0 0
    %931 = vmatprep.mubr.bf16.mxu0 0
    %932 = vmatmul.mubr.bf16.gmra.mrb[0].mxu0 %v857
    %v933 = vpop.f32.mrb[0].mxu0
    %v934 = vadd.f32 0.0, %v933
    %v935 = vpop.f32.mrb[0].mxu0
    %v936 = vadd.f32 0.0, %v935
    %v937 = vpop.f32.mrb[0].mxu0
    %v938 = vpop.f32.mrb[0].mxu0
    %939 = vdwg.mxu0
    %v940 = vadd.f32 %v853, %v893
    %v941 = vadd.f32 %v854, %v895
    %v942 = vadd.f32 %v855, %v934
    %v943 = vadd.f32 %v856, %v936
    %v944 = vtanh.pop %v940
    %v945 = vtanh.pop %v941
    %v946 = vtanh.pop %v942
    %v947 = vtanh.pop %v943
    %v948 = vmul.f32 %v944, 0.5
    %v949 = vadd.f32 %v948, 0.5
    %v950 = vmul.f32 %v945, 0.5
    %v951 = vadd.f32 %v950, 0.5
    %v952 = vmul.f32 %v947, 0.5
    %v953 = vadd.f32 %v952, 0.5
    %v954 = vmul.f32 %v951, %v847
    %v955 = vmul.f32 %v949, %v946
    %v956 = vadd.f32 %v954, %v955
    %v957 = vtanh.pop %v956
    %v958 = vmul.f32 %v953, %v957
    %s959 = smul.u32 5, 4
    %s960 = smul.addr %s959, 8
    %s961 = scalar_lea.vmem [#allocation2], %s960
    %v962 = vld [vmem:[%s961] sm:$0xff]
    %v963 = vld [vmem:[%s961 + $0x8] sm:$0xff]
    %v964 = vld [vmem:[%s961 + $0x10] sm:$0xff]
    %v965 = vld [vmem:[%s961 + $0x18] sm:$0xff]
    %v966 = vpack.c.bf16 %v958, %v958
    %967 = vmatprep.subr.bf16.mxu0 %v391
    %968 = vmatpush1.bf16.msra.mxu0 %v390
    %969 = vmatprep.subr.bf16.mxu0 %v395
    %970 = vmatpush1.bf16.msra.mxu0 %v394
    %971 = vmatprep.subr.bf16.mxu0 %v399
    %972 = vmatpush1.bf16.msra.mxu0 %v398
    %973 = vmatprep.subr.bf16.mxu0 %v403
    %974 = vmatpush1.bf16.msra.mxu0 %v402
    %975 = vmatprep.subr.bf16.mxu0 %v407
    %976 = vmatpush1.bf16.msra.mxu0 %v406
    %977 = vmatprep.subr.bf16.mxu0 %v411
    %978 = vmatpush1.bf16.msra.mxu0 %v410
    %979 = vmatprep.subr.bf16.mxu0 %v415
    %980 = vmatpush1.bf16.msra.mxu0 %v414
    %981 = vmatprep.subr.bf16.mxu0 %v419
    %982 = vmatpush1.bf16.msra.mxu0 %v418
    %983 = vmatprep.subr.bf16.mxu0 0
    %984 = vmatpush1.bf16.msra.mxu0 0
    %985 = vmatprep.subr.bf16.mxu0 0
    %986 = vmatpush1.bf16.msra.mxu0 0
    %987 = vmatprep.subr.bf16.mxu0 0
    %988 = vmatpush1.bf16.msra.mxu0 0
    %989 = vmatprep.subr.bf16.mxu0 0
    %990 = vmatpush1.bf16.msra.mxu0 0
    %991 = vmatprep.subr.bf16.mxu0 0
    %992 = vmatpush1.bf16.msra.mxu0 0
    %993 = vmatprep.subr.bf16.mxu0 0
    %994 = vmatpush1.bf16.msra.mxu0 0
    %995 = vmatprep.subr.bf16.mxu0 0
    %996 = vmatpush1.bf16.msra.mxu0 0
    %997 = vmatprep.subr.bf16.mxu0 0
    %998 = vmatpush1.bf16.msra.mxu0 0
    %999 = vmatprep.mubr.bf16.mxu0 0
    %1000 = vmatmul.mubr.bf16.gmra.mrb[0].mxu0 %v966
    %v1001 = vpop.f32.mrb[0].mxu0
    %v1002 = vadd.f32 0.0, %v1001
    %v1003 = vpop.f32.mrb[0].mxu0
    %v1004 = vadd.f32 0.0, %v1003
    %v1005 = vpop.f32.mrb[0].mxu0
    %v1006 = vpop.f32.mrb[0].mxu0
    %1007 = vdwg.mxu0
    %1008 = vmatprep.subr.bf16.mxu0 %v393
    %1009 = vmatpush1.bf16.msra.mxu0 %v392
    %1010 = vmatprep.subr.bf16.mxu0 %v397
    %1011 = vmatpush1.bf16.msra.mxu0 %v396
    %1012 = vmatprep.subr.bf16.mxu0 %v401
    %1013 = vmatpush1.bf16.msra.mxu0 %v400
    %1014 = vmatprep.subr.bf16.mxu0 %v405
    %1015 = vmatpush1.bf16.msra.mxu0 %v404
    %1016 = vmatprep.subr.bf16.mxu0 %v409
    %1017 = vmatpush1.bf16.msra.mxu0 %v408
    %1018 = vmatprep.subr.bf16.mxu0 %v413
    %1019 = vmatpush1.bf16.msra.mxu0 %v412
    %1020 = vmatprep.subr.bf16.mxu0 %v417
    %1021 = vmatpush1.bf16.msra.mxu0 %v416
    %1022 = vmatprep.subr.bf16.mxu0 %v421
    %1023 = vmatpush1.bf16.msra.mxu0 %v420
    %1024 = vmatprep.subr.bf16.mxu0 0
    %1025 = vmatpush1.bf16.msra.mxu0 0
    %1026 = vmatprep.subr.bf16.mxu0 0
    %1027 = vmatpush1.bf16.msra.mxu0 0
    %1028 = vmatprep.subr.bf16.mxu0 0
    %1029 = vmatpush1.bf16.msra.mxu0 0
    %1030 = vmatprep.subr.bf16.mxu0 0
    %1031 = vmatpush1.bf16.msra.mxu0 0
    %1032 = vmatprep.subr.bf16.mxu0 0
    %1033 = vmatpush1.bf16.msra.mxu0 0
    %1034 = vmatprep.subr.bf16.mxu0 0
    %1035 = vmatpush1.bf16.msra.mxu0 0
    %1036 = vmatprep.subr.bf16.mxu0 0
    %1037 = vmatpush1.bf16.msra.mxu0 0
    %1038 = vmatprep.subr.bf16.mxu0 0
    %1039 = vmatpush1.bf16.msra.mxu0 0
    %1040 = vmatprep.mubr.bf16.mxu0 0
    %1041 = vmatmul.mubr.bf16.gmra.mrb[0].mxu0 %v966
    %v1042 = vpop.f32.mrb[0].mxu0
    %v1043 = vadd.f32 0.0, %v1042
    %v1044 = vpop.f32.mrb[0].mxu0
    %v1045 = vadd.f32 0.0, %v1044
    %v1046 = vpop.f32.mrb[0].mxu0
    %v1047 = vpop.f32.mrb[0].mxu0
    %1048 = vdwg.mxu0
    %v1049 = vadd.f32 %v962, %v1002
    %v1050 = vadd.f32 %v963, %v1004
    %v1051 = vadd.f32 %v964, %v1043
    %v1052 = vadd.f32 %v965, %v1045
    %v1053 = vtanh.pop %v1049
    %v1054 = vtanh.pop %v1050
    %v1055 = vtanh.pop %v1051
    %v1056 = vtanh.pop %v1052
    %v1057 = vmul.f32 %v1053, 0.5
    %v1058 = vadd.f32 %v1057, 0.5
    %v1059 = vmul.f32 %v1054, 0.5
    %v1060 = vadd.f32 %v1059, 0.5
    %v1061 = vmul.f32 %v1056, 0.5
    %v1062 = vadd.f32 %v1061, 0.5
    %v1063 = vmul.f32 %v1060, %v956
    %v1064 = vmul.f32 %v1058, %v1055
    %v1065 = vadd.f32 %v1063, %v1064
    %v1066 = vtanh.pop %v1065
    %v1067 = vmul.f32 %v1062, %v1066
    %s1068 = smul.u32 6, 4
    %s1069 = smul.addr %s1068, 8
    %s1070 = scalar_lea.vmem [#allocation2], %s1069
    %v1071 = vld [vmem:[%s1070] sm:$0xff]
    %v1072 = vld [vmem:[%s1070 + $0x8] sm:$0xff]
    %v1073 = vld [vmem:[%s1070 + $0x10] sm:$0xff]
    %v1074 = vld [vmem:[%s1070 + $0x18] sm:$0xff]
    %v1075 = vpack.c.bf16 %v1067, %v1067
    %1076 = vmatprep.subr.bf16.mxu0 %v391
    %1077 = vmatpush1.bf16.msra.mxu0 %v390
    %1078 = vmatprep.subr.bf16.mxu0 %v395
    %1079 = vmatpush1.bf16.msra.mxu0 %v394
    %1080 = vmatprep.subr.bf16.mxu0 %v399
    %1081 = vmatpush1.bf16.msra.mxu0 %v398
    %1082 = vmatprep.subr.bf16.mxu0 %v403
    %1083 = vmatpush1.bf16.msra.mxu0 %v402
    %1084 = vmatprep.subr.bf16.mxu0 %v407
    %1085 = vmatpush1.bf16.msra.mxu0 %v406
    %1086 = vmatprep.subr.bf16.mxu0 %v411
    %1087 = vmatpush1.bf16.msra.mxu0 %v410
    %1088 = vmatprep.subr.bf16.mxu0 %v415
    %1089 = vmatpush1.bf16.msra.mxu0 %v414
    %1090 = vmatprep.subr.bf16.mxu0 %v419
    %1091 = vmatpush1.bf16.msra.mxu0 %v418
    %1092 = vmatprep.subr.bf16.mxu0 0
    %1093 = vmatpush1.bf16.msra.mxu0 0
    %1094 = vmatprep.subr.bf16.mxu0 0
    %1095 = vmatpush1.bf16.msra.mxu0 0
    %1096 = vmatprep.subr.bf16.mxu0 0
    %1097 = vmatpush1.bf16.msra.mxu0 0
    %1098 = vmatprep.subr.bf16.mxu0 0
    %1099 = vmatpush1.bf16.msra.mxu0 0
    %1100 = vmatprep.subr.bf16.mxu0 0
    %1101 = vmatpush1.bf16.msra.mxu0 0
    %1102 = vmatprep.subr.bf16.mxu0 0
    %1103 = vmatpush1.bf16.msra.mxu0 0
    %1104 = vmatprep.subr.bf16.mxu0 0
    %1105 = vmatpush1.bf16.msra.mxu0 0
    %1106 = vmatprep.subr.bf16.mxu0 0
    %1107 = vmatpush1.bf16.msra.mxu0 0
    %1108 = vmatprep.mubr.bf16.mxu0 0
    %1109 = vmatmul.mubr.bf16.gmra.mrb[0].mxu0 %v1075
    %v1110 = vpop.f32.mrb[0].mxu0
    %v1111 = vadd.f32 0.0, %v1110
    %v1112 = vpop.f32.mrb[0].mxu0
    %v1113 = vadd.f32 0.0, %v1112
    %v1114 = vpop.f32.mrb[0].mxu0
    %v1115 = vpop.f32.mrb[0].mxu0
    %1116 = vdwg.mxu0
    %1117 = vmatprep.subr.bf16.mxu0 %v393
    %1118 = vmatpush1.bf16.msra.mxu0 %v392
    %1119 = vmatprep.subr.bf16.mxu0 %v397
    %1120 = vmatpush1.bf16.msra.mxu0 %v396
    %1121 = vmatprep.subr.bf16.mxu0 %v401
    %1122 = vmatpush1.bf16.msra.mxu0 %v400
    %1123 = vmatprep.subr.bf16.mxu0 %v405
    %1124 = vmatpush1.bf16.msra.mxu0 %v404
    %1125 = vmatprep.subr.bf16.mxu0 %v409
    %1126 = vmatpush1.bf16.msra.mxu0 %v408
    %1127 = vmatprep.subr.bf16.mxu0 %v413
    %1128 = vmatpush1.bf16.msra.mxu0 %v412
    %1129 = vmatprep.subr.bf16.mxu0 %v417
    %1130 = vmatpush1.bf16.msra.mxu0 %v416
    %1131 = vmatprep.subr.bf16.mxu0 %v421
    %1132 = vmatpush1.bf16.msra.mxu0 %v420
    %1133 = vmatprep.subr.bf16.mxu0 0
    %1134 = vmatpush1.bf16.msra.mxu0 0
    %1135 = vmatprep.subr.bf16.mxu0 0
    %1136 = vmatpush1.bf16.msra.mxu0 0
    %1137 = vmatprep.subr.bf16.mxu0 0
    %1138 = vmatpush1.bf16.msra.mxu0 0
    %1139 = vmatprep.subr.bf16.mxu0 0
    %1140 = vmatpush1.bf16.msra.mxu0 0
    %1141 = vmatprep.subr.bf16.mxu0 0
    %1142 = vmatpush1.bf16.msra.mxu0 0
    %1143 = vmatprep.subr.bf16.mxu0 0
    %1144 = vmatpush1.bf16.msra.mxu0 0
    %1145 = vmatprep.subr.bf16.mxu0 0
    %1146 = vmatpush1.bf16.msra.mxu0 0
    %1147 = vmatprep.subr.bf16.mxu0 0
    %1148 = vmatpush1.bf16.msra.mxu0 0
    %1149 = vmatprep.mubr.bf16.mxu0 0
    %1150 = vmatmul.mubr.bf16.gmra.mrb[0].mxu0 %v1075
    %v1151 = vpop.f32.mrb[0].mxu0
    %v1152 = vadd.f32 0.0, %v1151
    %v1153 = vpop.f32.mrb[0].mxu0
    %v1154 = vadd.f32 0.0, %v1153
    %v1155 = vpop.f32.mrb[0].mxu0
    %v1156 = vpop.f32.mrb[0].mxu0
    %1157 = vdwg.mxu0
    %v1158 = vadd.f32 %v1071, %v1111
    %v1159 = vadd.f32 %v1072, %v1113
    %v1160 = vadd.f32 %v1073, %v1152
    %v1161 = vadd.f32 %v1074, %v1154
    %v1162 = vtanh.pop %v1158
    %v1163 = vtanh.pop %v1159
    %v1164 = vtanh.pop %v1160
    %v1165 = vtanh.pop %v1161
    %v1166 = vmul.f32 %v1162, 0.5
    %v1167 = vadd.f32 %v1166, 0.5
    %v1168 = vmul.f32 %v1163, 0.5
    %v1169 = vadd.f32 %v1168, 0.5
    %v1170 = vmul.f32 %v1165, 0.5
    %v1171 = vadd.f32 %v1170, 0.5
    %v1172 = vmul.f32 %v1169, %v1065
    %v1173 = vmul.f32 %v1167, %v1164
    %v1174 = vadd.f32 %v1172, %v1173
    %v1175 = vtanh.pop %v1174
    %v1176 = vmul.f32 %v1171, %v1175
    %s1177 = smul.u32 7, 4
    %s1178 = smul.addr %s1177, 8
    %s1179 = scalar_lea.vmem [#allocation2], %s1178
    %v1180 = vld [vmem:[%s1179] sm:$0xff]
    %v1181 = vld [vmem:[%s1179 + $0x8] sm:$0xff]
    %v1182 = vld [vmem:[%s1179 + $0x10] sm:$0xff]
    %v1183 = vld [vmem:[%s1179 + $0x18] sm:$0xff]
    %v1184 = vpack.c.bf16 %v1176, %v1176
    %1185 = vmatprep.subr.bf16.mxu0 %v391
    %1186 = vmatpush1.bf16.msra.mxu0 %v390
    %1187 = vmatprep.subr.bf16.mxu0 %v395
    %1188 = vmatpush1.bf16.msra.mxu0 %v394
    %1189 = vmatprep.subr.bf16.mxu0 %v399
    %1190 = vmatpush1.bf16.msra.mxu0 %v398
    %1191 = vmatprep.subr.bf16.mxu0 %v403
    %1192 = vmatpush1.bf16.msra.mxu0 %v402
    %1193 = vmatprep.subr.bf16.mxu0 %v407
    %1194 = vmatpush1.bf16.msra.mxu0 %v406
    %1195 = vmatprep.subr.bf16.mxu0 %v411
    %1196 = vmatpush1.bf16.msra.mxu0 %v410
    %1197 = vmatprep.subr.bf16.mxu0 %v415
    %1198 = vmatpush1.bf16.msra.mxu0 %v414
    %1199 = vmatprep.subr.bf16.mxu0 %v419
    %1200 = vmatpush1.bf16.msra.mxu0 %v418
    %1201 = vmatprep.subr.bf16.mxu0 0
    %1202 = vmatpush1.bf16.msra.mxu0 0
    %1203 = vmatprep.subr.bf16.mxu0 0
    %1204 = vmatpush1.bf16.msra.mxu0 0
    %1205 = vmatprep.subr.bf16.mxu0 0
    %1206 = vmatpush1.bf16.msra.mxu0 0
    %1207 = vmatprep.subr.bf16.mxu0 0
    %1208 = vmatpush1.bf16.msra.mxu0 0
    %1209 = vmatprep.subr.bf16.mxu0 0
    %1210 = vmatpush1.bf16.msra.mxu0 0
    %1211 = vmatprep.subr.bf16.mxu0 0
    %1212 = vmatpush1.bf16.msra.mxu0 0
    %1213 = vmatprep.subr.bf16.mxu0 0
    %1214 = vmatpush1.bf16.msra.mxu0 0
    %1215 = vmatprep.subr.bf16.mxu0 0
    %1216 = vmatpush1.bf16.msra.mxu0 0
    %1217 = vmatprep.mubr.bf16.mxu0 0
    %1218 = vmatmul.mubr.bf16.gmra.mrb[0].mxu0 %v1184
    %v1219 = vpop.f32.mrb[0].mxu0
    %v1220 = vadd.f32 0.0, %v1219
    %v1221 = vpop.f32.mrb[0].mxu0
    %v1222 = vadd.f32 0.0, %v1221
    %v1223 = vpop.f32.mrb[0].mxu0
    %v1224 = vpop.f32.mrb[0].mxu0
    %1225 = vdwg.mxu0
    %1226 = vmatprep.subr.bf16.mxu0 %v393
    %1227 = vmatpush1.bf16.msra.mxu0 %v392
    %1228 = vmatprep.subr.bf16.mxu0 %v397
    %1229 = vmatpush1.bf16.msra.mxu0 %v396
    %1230 = vmatprep.subr.bf16.mxu0 %v401
    %1231 = vmatpush1.bf16.msra.mxu0 %v400
    %1232 = vmatprep.subr.bf16.mxu0 %v405
    %1233 = vmatpush1.bf16.msra.mxu0 %v404
    %1234 = vmatprep.subr.bf16.mxu0 %v409
    %1235 = vmatpush1.bf16.msra.mxu0 %v408
    %1236 = vmatprep.subr.bf16.mxu0 %v413
    %1237 = vmatpush1.bf16.msra.mxu0 %v412
    %1238 = vmatprep.subr.bf16.mxu0 %v417
    %1239 = vmatpush1.bf16.msra.mxu0 %v416
    %1240 = vmatprep.subr.bf16.mxu0 %v421
    %1241 = vmatpush1.bf16.msra.mxu0 %v420
    %1242 = vmatprep.subr.bf16.mxu0 0
    %1243 = vmatpush1.bf16.msra.mxu0 0
    %1244 = vmatprep.subr.bf16.mxu0 0
    %1245 = vmatpush1.bf16.msra.mxu0 0
    %1246 = vmatprep.subr.bf16.mxu0 0
    %1247 = vmatpush1.bf16.msra.mxu0 0
    %1248 = vmatprep.subr.bf16.mxu0 0
    %1249 = vmatpush1.bf16.msra.mxu0 0
    %1250 = vmatprep.subr.bf16.mxu0 0
    %1251 = vmatpush1.bf16.msra.mxu0 0
    %1252 = vmatprep.subr.bf16.mxu0 0
    %1253 = vmatpush1.bf16.msra.mxu0 0
    %1254 = vmatprep.subr.bf16.mxu0 0
    %1255 = vmatpush1.bf16.msra.mxu0 0
    %1256 = vmatprep.subr.bf16.mxu0 0
    %1257 = vmatpush1.bf16.msra.mxu0 0
    %1258 = vmatprep.mubr.bf16.mxu0 0
    %1259 = vmatmul.mubr.bf16.gmra.mrb[0].mxu0 %v1184
    %v1260 = vpop.f32.mrb[0].mxu0
    %v1261 = vadd.f32 0.0, %v1260
    %v1262 = vpop.f32.mrb[0].mxu0
    %v1263 = vadd.f32 0.0, %v1262
    %v1264 = vpop.f32.mrb[0].mxu0
    %v1265 = vpop.f32.mrb[0].mxu0
    %1266 = vdwg.mxu0
    %v1267 = vadd.f32 %v1180, %v1220
    %v1268 = vadd.f32 %v1181, %v1222
    %v1269 = vadd.f32 %v1182, %v1261
    %v1270 = vadd.f32 %v1183, %v1263
    %v1271 = vtanh.pop %v1267
    %v1272 = vtanh.pop %v1268
    %v1273 = vtanh.pop %v1269
    %v1274 = vtanh.pop %v1270
    %v1275 = vmul.f32 %v1271, 0.5
    %v1276 = vadd.f32 %v1275, 0.5
    %v1277 = vmul.f32 %v1272, 0.5
    %v1278 = vadd.f32 %v1277, 0.5
    %v1279 = vmul.f32 %v1274, 0.5
    %v1280 = vadd.f32 %v1279, 0.5
    %v1281 = vmul.f32 %v1278, %v1174
    %v1282 = vmul.f32 %v1276, %v1273
    %v1283 = vadd.f32 %v1281, %v1282
    %v1284 = vtanh.pop %v1283
    %v1285 = vmul.f32 %v1280, %v1284
    %v1286 = vld [vmem:[%s4] sm:$0x1]
    %v1287 = vlaneseq
    %v1288 = vshrl.u32 %v1287, 7
    %v1289 = vsub.s32 0, %v1288
    %v1290 = vrot.slane %v1286, %v1289
    %v1291 = vmul.f32 %v1285, %v1290
    %1292 = vadd.xlane.f32.xlu0 %v1291
    %v1293 = vpop.xlane.xlu0 %1292
    %v1294 = vld [vmem:[%s4 + $0x1] sm:$0x1]
    %v1295 = vlaneseq
    %v1296 = vshrl.u32 %v1295, 7
    %v1297 = vsub.s32 0, %v1296
    %v1298 = vrot.slane %v1294, %v1297
    %v1299 = vmul.f32 %v1283, %v1298
    %1300 = vadd.xlane.f32.xlu0 %v1299
    %v1301 = vpop.xlane.xlu0 %1300
    %v1302 = vadd.f32 %v1293, %v1301
    %s1303 = sld [smem:[#allocation5]]
    %v1304 = vstv %s1303
    %v1305 = vadd.f32 %v1302, %v1304
    %vm1306 = vcmask 1024
    %1307 = vst.msk [vmem:[%s6] sm:$0x3] %vm1306, %v1305
    // Predicated region
    $region22: #{tpu_custom_call.1} parent=1 // pred_check
      _
    $region23: #{tpu_custom_call.1} parent=1 // pred_check_branch
      %1309 = sbr.rel (0) target = $region25
    $region24: #{tpu_custom_call.1} parent=1 // pred_region
      _
    $region25: #{tpu_custom_call.1} parent=1 // pred_fallthru
      _
    // Predicated region
    $region26: #{tpu_custom_call.1} parent=1 // pred_check
      _
    $region27: #{tpu_custom_call.1} parent=1 // pred_check_branch
      %1311 = sbr.rel (0) target = $region29
    $region28: #{tpu_custom_call.1} parent=1 // pred_region
      _
    $region29: #{tpu_custom_call.1} parent=1 // pred_fallthru
      _
  %1312 = vsyncmov [#allocation4]
  %s1313 = vpop.sfrf %1312
  %p1314 = scmp.eq.s32.totalorder %s1313, 0
  %p1315 = pneg %p1314
  %1317 = shalt.err (%p1315)

</llo_original>
